<compile_context>
chip_gen: v7x
topology: tpu7x:2x2x1
jax: 0.10.0
libtpu: 0.0.40
codegen_flags: <defaults>
</compile_context>

<pallas_src>
import jax
import jax.numpy as jnp
from jax import lax
from jax.experimental import pallas as pl
from jax.experimental.pallas import tpu as pltpu

_LANE = 128


# ----------------------------------------------------------------------------
# Generation-aware VMEM budgets
# ----------------------------------------------------------------------------
def _vmem_capacity_bytes():
    """Physical per-core VMEM; conservative 64 MiB (v7x) if the query fails."""
    try:
        fn = getattr(pltpu, "get_tpu_info", None)
        if fn is not None:
            cap = getattr(fn(), "vmem_capacity_bytes", None)
            if cap:
                return int(cap)
    except Exception:
        pass
    return 64 * 1024 * 1024


_VMEM_PHYSICAL = _vmem_capacity_bytes()
# Budget for pipelined block data (inputs + outputs, double-buffered).
_BLOCK_BUDGET = (_VMEM_PHYSICAL * 3) // 8            # 24 MiB v7x, 48 MiB v5e/v6e
# Scoped VMEM requested from Mosaic (block data + headroom).
_VMEM_LIMIT = min(_VMEM_PHYSICAL // 2, 96 * 1024 * 1024)

_PARAMS_STATS = pltpu.CompilerParams(
    dimension_semantics=("parallel", "arbitrary"),   # batch parallel, lane-tile reduce
    vmem_limit_bytes=_VMEM_LIMIT,
)
_PARAMS_WHITEN = pltpu.CompilerParams(
    dimension_semantics=("parallel", "parallel"),
    vmem_limit_bytes=_VMEM_LIMIT,
)


def _round_down_lane(n):
    return (n // _LANE) * _LANE


def _pick_tile(hw_padded, c, in_item, out_item):
    """Largest multiple of 128 dividing hw_padded whose (stricter, whiten) block fits
    the VMEM budget: 2 pipeline buffers * (in + out) * C * tile * itemsize."""
    per_lane = 2 * c * (in_item + out_item)
    cap = max(_LANE, _round_down_lane(_BLOCK_BUDGET // max(per_lane, 1)))
    best = _LANE
    t = _LANE
    upper = min(hw_padded, cap)
    while t <= upper:
        if hw_padded % t == 0:
            best = t
        t += _LANE
    return best


def _pick_batch_block(n, c, tile, in_item, out_item):
    """Batch elements per whiten grid step (amortizes ~0.35us/step for small HW/N)."""
    per_batch = 2 * c * tile * (in_item + out_item)
    cap = max(1, _BLOCK_BUDGET // max(per_batch, 1))
    bn = 1
    for cand in range(2, min(n, 8, cap) + 1):
        if n % cand == 0:
            bn = cand
    return bn


# ----------------------------------------------------------------------------
# Pallas kernels
# ----------------------------------------------------------------------------
def _stats_kernel(x_ref, sum_ref, xxt_ref):
    """Per-batch partial channel sums and Gram, accumulated over lane tiles.

    x_ref:   (1, C, T)  native dtype
    sum_ref: (1, C, 1)  f32 per-batch partial (block index constant across t)
    xxt_ref: (1, C, C)  f32 per-batch partial Gram
    """
    @pl.when(pl.program_id(1) == 0)
    def _():
        sum_ref[...] = jnp.zeros_like(sum_ref)
        xxt_ref[...] = jnp.zeros_like(xxt_ref)

    xb = x_ref[0]                                              # (C, T) native dtype
    # Channel sum: convert fused into the reduce; hidden under the tile DMA.
    sum_ref[0] += jnp.sum(xb, axis=1, keepdims=True, dtype=jnp.float32)
    # Gram block on the MXU (contract over the lane axis), f32 accumulate.
    xxt_ref[0] += lax.dot_general(
        xb, xb,
        dimension_numbers=(((1,), (1,)), ((), ())),
        preferred_element_type=jnp.float32,
    )


def _whiten_kernel(s_ref, b_ref, x_ref, o_ref):
    """o[i] = S' @ x[i] + b' for each of the Bn batch elements in the block."""
    s = s_ref[...]                                             # (C, C) x.dtype
    b = b_ref[...]                                             # (C, 1) f32
    for i in range(x_ref.shape[0]):                            # Bn, static unroll
        y = lax.dot_general(
            s, x_ref[i],
            dimension_numbers=(((1,), (0,)), ((), ())),
            preferred_element_type=jnp.float32,
        )                                                      # (C, T) f32
        o_ref[i] = (y + b).astype(o_ref.dtype)


# ----------------------------------------------------------------------------
# pallas_call wrappers
# ----------------------------------------------------------------------------
def _pallas_stats(x3, tile):
    N, C, HWp = x3.shape
    grid = (N, HWp // tile)
    return pl.pallas_call(
        _stats_kernel,
        grid=grid,
        in_specs=[pl.BlockSpec((1, C, tile), lambda n, t: (n, 0, t))],
        out_specs=(
            pl.BlockSpec((1, C, 1), lambda n, t: (n, 0, 0)),
            pl.BlockSpec((1, C, C), lambda n, t: (n, 0, 0)),
        ),
        out_shape=(
            jax.ShapeDtypeStruct((N, C, 1), jnp.float32),
            jax.ShapeDtypeStruct((N, C, C), jnp.float32),
        ),
        compiler_params=_PARAMS_STATS,
    )(x3)


def _pallas_whiten(s_w, b_w, x3, tile, bn):
    N, C, HWp = x3.shape
    grid = (N // bn, HWp // tile)
    return pl.pallas_call(
        _whiten_kernel,
        grid=grid,
        in_specs=[
            pl.BlockSpec((C, C), lambda n, t: (0, 0)),
            pl.BlockSpec((C, 1), lambda n, t: (0, 0)),
            pl.BlockSpec((bn, C, tile), lambda n, t: (n, 0, t)),
        ],
        out_specs=pl.BlockSpec((bn, C, tile), lambda n, t: (n, 0, t)),
        out_shape=jax.ShapeDtypeStruct((N, C, HWp), x3.dtype),
        compiler_params=_PARAMS_WHITEN,
    )(s_w, b_w, x3)


# ----------------------------------------------------------------------------
# Tiny per-group eigendecomposition + deflation (plain JAX, on device, jittable)
# ----------------------------------------------------------------------------
def _group_subspaces(xxt, G, L):
    """Mirrors the per-group training-mode loop of ZCANormPI_fails_group_is_4."""
    blocks = xxt.reshape(G, L, G, L)
    idx = jnp.arange(G)
    A0 = blocks[idx, :, idx, :]                                # (G, L, L) diag blocks

    # torch.svd of a symmetric PSD block == eigh with descending eigenvalues.
    e, v = jnp.linalg.eigh(A0)                                 # ascending
    e = jnp.flip(e, axis=-1)                                   # (G, L)   descending
    v = jnp.flip(v, axis=-1)                                   # (G, L, L)

    ratio = jnp.cumsum(e, axis=-1) / jnp.sum(e, axis=-1, keepdims=True)
    hit = ratio >= 1.0
    counter = jnp.where(jnp.any(hit, axis=-1),
                        jnp.argmax(hit, axis=-1) + 1, L)       # (G,)

    A = A0
    subspace = jnp.zeros_like(A0)
    for j in range(L):                                         # static unroll, L tiny
        include = (j < counter)[:, None, None]                 # (G, 1, 1)
        vj = v[:, :, j:j + 1]                                  # (G, L, 1)
        vjT = jnp.swapaxes(vj, 1, 2)                           # (G, 1, L)
        Av = A @ vj
        lam = (jnp.sum(Av * vj, axis=1, keepdims=True)
               / jnp.sum(vj * vj, axis=1, keepdims=True))      # (G, 1, 1)
        term = lax.rsqrt(lam) * (vj @ vjT)                     # (G, L, L)
        subspace = subspace + jnp.where(include, term, 0.0)
        A = jnp.where(include, A - A @ (vj @ vjT), A)
    return subspace                                            # (G, L, L)


# ----------------------------------------------------------------------------
# Full forward (training branch of the PyTorch module)
# ----------------------------------------------------------------------------
def _forward_impl(x, weight, bias, running_mean, running_subspaces,
                  groups, eps, momentum):
    N, C, H, W = x.shape
    G = groups
    assert C % G == 0
    L = C // G
    HW = H * W
    M = N * HW

    x3 = x.reshape(N, C, HW)                       # free reshape, no transpose
    HWp = ((HW + _LANE - 1) // _LANE) * _LANE
    if HWp != HW:
        # Pad lanes so every load/store is unmasked lane-dense; zero columns
        # contribute nothing to sum / Gram and padded outputs are sliced off.
        x3 = jnp.pad(x3, ((0, 0), (0, 0), (0, HWp - HW)))

    in_item = x.dtype.itemsize
    tile = _pick_tile(HWp, C, in_item, in_item)
    bn = _pick_batch_block(N, C, tile, in_item, in_item)

    # ---- Pallas pass 1: per-batch partial channel sums + Gram matrices
    s_parts, xxt_parts = _pallas_stats(x3, tile)
    s = jnp.sum(s_parts, axis=0)                   # (C, 1) tiny glue
    sxxt = jnp.sum(xxt_parts, axis=0)              # (C, C)
    mu = s / float(M)
    # one-pass covariance:  xc @ xc^T / M  ==  X X^T / M - mu mu^T
    # (f32 accumulation; small cancellation risk vs. the centered reference.)
    xxt = sxxt / float(M) - mu @ mu.T + eps * jnp.eye(C, dtype=jnp.float32)

    # ---- tiny per-group eigendecomposition + deflation (on device)
    subs = _group_subspaces(xxt, G, L)             # (G, L, L)

    # ---- block-diagonal whitening matrix with weight / mean folded in
    eye_g = jnp.eye(G, dtype=subs.dtype)
    S_blk = (subs[:, :, None, :] * eye_g[:, None, :, None]).reshape(C, C)
    w32 = weight.astype(jnp.float32).reshape(C, 1)
    b32 = bias.astype(jnp.float32).reshape(C, 1)
    S_w = w32 * S_blk                              # diag(weight) @ S_blockdiag
    b_w = b32 - S_w @ mu                           # fold mean subtraction into bias

    # ---- Pallas pass 2: out = S' @ x + b' in the (N, C, HWp) layout
    out3 = _pallas_whiten(S_w.astype(x.dtype), b_w, x3, tile, bn)
    if HWp != HW:
        out3 = out3[:, :, :HW]
    xr = out3.reshape(N, C, H, W)

    # running-stat side effects of the training forward
    new_running_mean = (1.0 - momentum) * running_mean + momentum * mu
    new_running_subspaces = (1.0 - momentum) * running_subspaces + momentum * subs
    return xr, new_running_mean, new_running_subspaces


_forward_jit = jax.jit(_forward_impl, static_argnums=(5, 6, 7))


def zca_norm_pi_forward(x, weight, bias, running_mean=None, running_subspaces=None,
                        *, groups=4, eps=1e-4, momentum=0.1):
    """x: (N, C, H, W).  Returns (xr, new_running_mean, new_running_subspaces)."""
    N, C, H, W = x.shape
    L = C // groups
    if running_mean is None:
        running_mean = jnp.zeros((C, 1), dtype=jnp.float32)
    if running_subspaces is None:
        running_subspaces = jnp.tile(jnp.eye(L, dtype=jnp.float32)[None], (groups, 1, 1))
    return _forward_jit(x, weight, bias, running_mean, running_subspaces,
                        groups, float(eps), float(momentum))


# ----------------------------------------------------------------------------
# Pure-JAX reference (same math, no Pallas) used only for validation in __main__
# ----------------------------------------------------------------------------
def _reference_forward(x, weight, bias, running_mean, running_subspaces,
                       groups, eps, momentum):
    N, C, H, W = x.shape
    G, L = groups, C // groups
    M = N * H * W
    xc = jnp.transpose(x.reshape(N, C, H * W), (1, 0, 2)).reshape(C, M).astype(jnp.float32)
    mu = xc.mean(axis=1, keepdims=True)
    xxt = xc @ xc.T / M - mu @ mu.T + eps * jnp.eye(C, dtype=jnp.float32)
    subs = _group_subspaces(xxt, G, L)
    eye_g = jnp.eye(G, dtype=subs.dtype)
    S_blk = (subs[:, :, None, :] * eye_g[:, None, :, None]).reshape(C, C)
    S_w = weight.astype(jnp.float32).reshape(C, 1) * S_blk
    b_w = bias.astype(jnp.float32).reshape(C, 1) - S_w @ mu
    out = (S_w @ xc + b_w).reshape(C, N, H, W)
    out = jnp.transpose(out, (1, 0, 2, 3)).astype(x.dtype)
    rm = (1.0 - momentum) * running_mean + momentum * mu
    rs = (1.0 - momentum) * running_subspaces + momentum * subs
    return out, rm, rs


# ----------------------------------------------------------------------------
if __name__ == "__main__":
    key = jax.random.PRNGKey(0)
    k_x, k_w = jax.random.split(key)

    # num_features = C = 16, groups = 4  ->  group length L = 4
    N, C, H, W = 2, 16, 16, 16
    groups = 4
    x = jax.random.normal(k_x, (N, C, H, W), dtype=jnp.float32)

    # Parameter init mirroring reset_parameters(): weight.uniform_(), bias.zero_()
    weight = jax.random.uniform(k_w, (C, 1), dtype=jnp.float32)
    bias = jnp.zeros((C, 1), dtype=jnp.float32)

    out, run_mean, run_subs = zca_norm_pi_forward(
        x, weight, bias, groups=groups, eps=1e-4, momentum=0.1
    )
    jax.block_until_ready((out, run_mean, run_subs))

    assert out.shape == (N, C, H, W) and out.dtype == x.dtype
    assert run_mean.shape == (C, 1)
    assert run_subs.shape == (groups, C // groups, C // groups)

    # Validate the Pallas passes against a plain-JAX forward with the same math.
    ref_out, ref_rm, _ = _reference_forward(
        x, weight, bias,
        jnp.zeros((C, 1), jnp.float32),
        jnp.tile(jnp.eye(C // groups, dtype=jnp.float32)[None], (groups, 1, 1)),
        groups, 1e-4, 0.1)
    assert jnp.allclose(out, ref_out, rtol=1e-2, atol=1e-2)
    assert jnp.allclose(run_mean, ref_rm, rtol=1e-2, atol=1e-2)

    print("KERNEL_OK")
</pallas_src>

<mosaic_0001>
module attributes {stable_mosaic.version = 11 : i64} {
  func.func @_stats_kernel(%arg0: i32, %arg1: i32, %arg2: memref<1x16x256xf32, #tpu.memory_space<vmem>>, %arg3: memref<1x16x1xf32, #tpu.memory_space<vmem>>, %arg4: memref<1x16x16xf32, #tpu.memory_space<vmem>>) attributes {dimension_semantics = [#tpu.dimension_semantics<parallel>, #tpu.dimension_semantics<arbitrary>], iteration_bounds = array<i64: 2, 1>, scalar_prefetch = 0 : i64, scratch_operands = 0 : i64, tpu.core_type = #tpu.core_type<tc>, window_params = [{transform_indices = @transform_0, window_bounds = array<i64: 1, 16, 256>}, {transform_indices = @transform_1, window_bounds = array<i64: 1, 16, 1>}, {transform_indices = @transform_2, window_bounds = array<i64: 1, 16, 16>}]} {
    %c0_i32 = arith.constant 0 : i32
    %0 = arith.cmpi eq, %arg1, %c0_i32 : i32
    %1 = arith.extui %0 : i1 to i32
    %c0_i32_0 = arith.constant 0 : i32
    %2 = arith.cmpi ne, %1, %c0_i32_0 : i32
    scf.if %2 {
      %cst_16 = arith.constant 0.000000e+00 : f32
      %20 = vector.broadcast %cst_16 : f32 to vector<1x16x1xf32>
      %c0_17 = arith.constant 0 : index
      %c0_18 = arith.constant 0 : index
      %c0_19 = arith.constant 0 : index
      %21 = vector.load %arg3[%c0_17, %c0_18, %c0_19] : memref<1x16x1xf32, #tpu.memory_space<vmem>>, vector<1x16x1xf32>
      tpu.vector_store %arg3[%c0_17, %c0_18, %c0_19], %20 {strides = array<i32>} : memref<1x16x1xf32, #tpu.memory_space<vmem>>, vector<1x16x1xf32>,
      %cst_20 = arith.constant 0.000000e+00 : f32
      %22 = vector.broadcast %cst_20 : f32 to vector<1x16x16xf32>
      %c0_21 = arith.constant 0 : index
      %c0_22 = arith.constant 0 : index
      %c0_23 = arith.constant 0 : index
      %23 = vector.load %arg4[%c0_21, %c0_22, %c0_23] : memref<1x16x16xf32, #tpu.memory_space<vmem>>, vector<1x16x16xf32>
      tpu.vector_store %arg4[%c0_21, %c0_22, %c0_23], %22 {strides = array<i32>} : memref<1x16x16xf32, #tpu.memory_space<vmem>>, vector<1x16x16xf32>,
    } else {
    }
    %c0 = arith.constant 0 : index
    %c0_1 = arith.constant 0 : index
    %c0_2 = arith.constant 0 : index
    %3 = vector.load %arg2[%c0, %c0_1, %c0_2] : memref<1x16x256xf32, #tpu.memory_space<vmem>>, vector<1x16x256xf32>
    %4 = vector.shape_cast %3 : vector<1x16x256xf32> to vector<16x256xf32>
    %c0_3 = arith.constant 0 : index
    %c0_4 = arith.constant 0 : index
    %c0_5 = arith.constant 0 : index
    %5 = vector.load %arg3[%c0_3, %c0_4, %c0_5] : memref<1x16x1xf32, #tpu.memory_space<vmem>>, vector<1x16x1xf32>
    %6 = vector.shape_cast %5 : vector<1x16x1xf32> to vector<16x1xf32>
    %cst = arith.constant dense<0.000000e+00> : vector<16xf32>
    %7 = vector.multi_reduction <add>, %4, %cst [1] : vector<16x256xf32> to vector<16xf32>
    %8 = vector.shape_cast %7 : vector<16xf32> to vector<16x1xf32>
    %9 = arith.addf %6, %8 : vector<16x1xf32>
    %c0_6 = arith.constant 0 : index
    %c0_7 = arith.constant 0 : index
    %c0_8 = arith.constant 0 : index
    %10 = vector.load %arg3[%c0_6, %c0_7, %c0_8] : memref<1x16x1xf32, #tpu.memory_space<vmem>>, vector<1x16x1xf32>
    %11 = vector.shape_cast %10 : vector<1x16x1xf32> to vector<16x1xf32>
    %12 = vector.shape_cast %9 : vector<16x1xf32> to vector<1x16x1xf32>
    tpu.vector_store %arg3[%c0_6, %c0_7, %c0_8], %12 {strides = array<i32>} : memref<1x16x1xf32, #tpu.memory_space<vmem>>, vector<1x16x1xf32>,
    %c0_9 = arith.constant 0 : index
    %c0_10 = arith.constant 0 : index
    %c0_11 = arith.constant 0 : index
    %13 = vector.load %arg4[%c0_9, %c0_10, %c0_11] : memref<1x16x16xf32, #tpu.memory_space<vmem>>, vector<1x16x16xf32>
    %14 = vector.shape_cast %13 : vector<1x16x16xf32> to vector<16x16xf32>
    %cst_12 = arith.constant dense<0.000000e+00> : vector<16x16xf32>
    %15 = tpu.matmul %4, %4, %cst_12 {dimension_numbers = #tpu.dot_dimension_numbers<[1], [1], [0], [0], [0, 0, 1, 0], [], []>} : vector<16x256xf32>, vector<16x256xf32>, vector<16x16xf32> -> vector<16x16xf32>
    %16 = arith.addf %14, %15 : vector<16x16xf32>
    %c0_13 = arith.constant 0 : index
    %c0_14 = arith.constant 0 : index
    %c0_15 = arith.constant 0 : index
    %17 = vector.load %arg4[%c0_13, %c0_14, %c0_15] : memref<1x16x16xf32, #tpu.memory_space<vmem>>, vector<1x16x16xf32>
    %18 = vector.shape_cast %17 : vector<1x16x16xf32> to vector<16x16xf32>
    %19 = vector.shape_cast %16 : vector<16x16xf32> to vector<1x16x16xf32>
    tpu.vector_store %arg4[%c0_13, %c0_14, %c0_15], %19 {strides = array<i32>} : memref<1x16x16xf32, #tpu.memory_space<vmem>>, vector<1x16x16xf32>,
    return
  }
  func.func @transform_0(%arg0: i32, %arg1: i32) -> (i32, i32, i32) {
    %c0_i32 = arith.constant 0 : i32
    %c0_i32_0 = arith.constant 0 : i32
    return %arg0, %c0_i32, %arg1 : i32, i32, i32
  }
  func.func @transform_1(%arg0: i32, %arg1: i32) -> (i32, i32, i32) {
    %c0_i32 = arith.constant 0 : i32
    %c0_i32_0 = arith.constant 0 : i32
    %c0_i32_1 = arith.constant 0 : i32
    return %arg0, %c0_i32, %c0_i32_0 : i32, i32, i32
  }
  func.func @transform_2(%arg0: i32, %arg1: i32) -> (i32, i32, i32) {
    %c0_i32 = arith.constant 0 : i32
    %c0_i32_0 = arith.constant 0 : i32
    %c0_i32_1 = arith.constant 0 : i32
    return %arg0, %c0_i32, %c0_i32_0 : i32, i32, i32
  }
}

module attributes {stable_mosaic.version = 11 : i64} {
  func.func @_whiten_kernel(%arg0: i32, %arg1: i32, %arg2: memref<16x16xf32, #tpu.memory_space<vmem>>, %arg3: memref<16x1xf32, #tpu.memory_space<vmem>>, %arg4: memref<2x16x256xf32, #tpu.memory_space<vmem>>, %arg5: memref<2x16x256xf32, #tpu.memory_space<vmem>>) attributes {dimension_semantics = [#tpu.dimension_semantics<parallel>, #tpu.dimension_semantics<parallel>], iteration_bounds = array<i64: 1, 1>, scalar_prefetch = 0 : i64, scratch_operands = 0 : i64, tpu.core_type = #tpu.core_type<tc>, window_params = [{pipeline_mode = #tpu.pipeline_mode<synchronous>, transform_indices = @transform_0, window_bounds = array<i64: 16, 16>}, {pipeline_mode = #tpu.pipeline_mode<synchronous>, transform_indices = @transform_1, window_bounds = array<i64: 16, 1>}, {transform_indices = @transform_2, window_bounds = array<i64: 2, 16, 256>}, {transform_indices = @transform_3, window_bounds = array<i64: 2, 16, 256>}]} {
    %c0 = arith.constant 0 : index
    %c0_0 = arith.constant 0 : index
    %0 = vector.load %arg2[%c0, %c0_0] : memref<16x16xf32, #tpu.memory_space<vmem>>, vector<16x16xf32>
    %c0_1 = arith.constant 0 : index
    %c0_2 = arith.constant 0 : index
    %1 = vector.load %arg3[%c0_1, %c0_2] : memref<16x1xf32, #tpu.memory_space<vmem>>, vector<16x1xf32>
    %c0_3 = arith.constant 0 : index
    %c0_4 = arith.constant 0 : index
    %c0_5 = arith.constant 0 : index
    %2 = vector.load %arg4[%c0_3, %c0_4, %c0_5] : memref<2x16x256xf32, #tpu.memory_space<vmem>>, vector<1x16x256xf32>
    %3 = vector.shape_cast %2 : vector<1x16x256xf32> to vector<16x256xf32>
    %cst = arith.constant dense<0.000000e+00> : vector<16x256xf32>
    %4 = tpu.matmul %0, %3, %cst {dimension_numbers = #tpu.dot_dimension_numbers<[1], [0], [0], [1], [0, 0, 1, 1], [], []>} : vector<16x16xf32>, vector<16x256xf32>, vector<16x256xf32> -> vector<16x256xf32>
    %5 = vector.broadcast %1 : vector<16x1xf32> to vector<16x256xf32>
    %6 = arith.addf %4, %5 : vector<16x256xf32>
    %c0_6 = arith.constant 0 : index
    %c0_7 = arith.constant 0 : index
    %c0_8 = arith.constant 0 : index
    %7 = vector.load %arg5[%c0_6, %c0_7, %c0_8] : memref<2x16x256xf32, #tpu.memory_space<vmem>>, vector<1x16x256xf32>
    %8 = vector.shape_cast %7 : vector<1x16x256xf32> to vector<16x256xf32>
    %9 = vector.shape_cast %6 : vector<16x256xf32> to vector<1x16x256xf32>
    tpu.vector_store %arg5[%c0_6, %c0_7, %c0_8], %9 {strides = array<i32>} : memref<2x16x256xf32, #tpu.memory_space<vmem>>, vector<1x16x256xf32>,
    %c1 = arith.constant 1 : index
    %c0_9 = arith.constant 0 : index
    %c0_10 = arith.constant 0 : index
    %10 = vector.load %arg4[%c1, %c0_9, %c0_10] : memref<2x16x256xf32, #tpu.memory_space<vmem>>, vector<1x16x256xf32>
    %11 = vector.shape_cast %10 : vector<1x16x256xf32> to vector<16x256xf32>
    %cst_11 = arith.constant dense<0.000000e+00> : vector<16x256xf32>
    %12 = tpu.matmul %0, %11, %cst_11 {dimension_numbers = #tpu.dot_dimension_numbers<[1], [0], [0], [1], [0, 0, 1, 1], [], []>} : vector<16x16xf32>, vector<16x256xf32>, vector<16x256xf32> -> vector<16x256xf32>
    %13 = vector.broadcast %1 : vector<16x1xf32> to vector<16x256xf32>
    %14 = arith.addf %12, %13 : vector<16x256xf32>
    %c1_12 = arith.constant 1 : index
    %c0_13 = arith.constant 0 : index
    %c0_14 = arith.constant 0 : index
    %15 = vector.load %arg5[%c1_12, %c0_13, %c0_14] : memref<2x16x256xf32, #tpu.memory_space<vmem>>, vector<1x16x256xf32>
    %16 = vector.shape_cast %15 : vector<1x16x256xf32> to vector<16x256xf32>
    %17 = vector.shape_cast %14 : vector<16x256xf32> to vector<1x16x256xf32>
    tpu.vector_store %arg5[%c1_12, %c0_13, %c0_14], %17 {strides = array<i32>} : memref<2x16x256xf32, #tpu.memory_space<vmem>>, vector<1x16x256xf32>,
    return
  }
  func.func @transform_0(%arg0: i32, %arg1: i32) -> (i32, i32) {
    %c0_i32 = arith.constant 0 : i32
    %c0_i32_0 = arith.constant 0 : i32
    %c0_i32_1 = arith.constant 0 : i32
    return %c0_i32, %c0_i32_0 : i32, i32
  }
  func.func @transform_1(%arg0: i32, %arg1: i32) -> (i32, i32) {
    %c0_i32 = arith.constant 0 : i32
    %c0_i32_0 = arith.constant 0 : i32
    %c0_i32_1 = arith.constant 0 : i32
    return %c0_i32, %c0_i32_0 : i32, i32
  }
  func.func @transform_2(%arg0: i32, %arg1: i32) -> (i32, i32, i32) {
    %c0_i32 = arith.constant 0 : i32
    %c0_i32_0 = arith.constant 0 : i32
    return %arg0, %c0_i32, %arg1 : i32, i32, i32
  }
  func.func @transform_3(%arg0: i32, %arg1: i32) -> (i32, i32, i32) {
    %c0_i32 = arith.constant 0 : i32
    %c0_i32_0 = arith.constant 0 : i32
    return %arg0, %c0_i32, %arg1 : i32, i32, i32
  }
}

</mosaic_0001>

<llo_original>
// kernel: custom-call.2
$region0: #{custom-call.2}
  %s0 = inlined_call_operand.vmem [shape: f32[4,2,2], index: 0, kind: input, shape index: {}]
  %s1 = inlined_call_operand.vmem [shape: f32[4,2,2], index: 1, kind: input, shape index: {}]
  %s2 = inlined_call_operand.vmem [shape: f32[4,2,2], index: 2, kind: input, shape index: {}]
  %s3 = inlined_call_operand.vmem [shape: f32[4,2,2], index: 3, kind: input, shape index: {}]
  %s4 = inlined_call_operand.vmem [shape: f32[4,2], index: 4, kind: output, shape index: {0}]
  %s5 = inlined_call_operand.vmem [shape: f32[4,2], index: 5, kind: output, shape index: {1}]
  %s6 = inlined_call_operand.vmem [shape: f32[4,2,2], index: 6, kind: output, shape index: {2}]
  %s7 = inlined_call_operand.vmem [shape: f32[4,2,2], index: 7, kind: output, shape index: {3}]
  %s8 = inlined_call_operand.vmem [shape: f32[4,2,2], index: 8, kind: output, shape index: {4}]
  %s9 = inlined_call_operand.vmem [shape: f32[4,2,2], index: 9, kind: output, shape index: {5}]
  %10 = xla_tuple %s4, %s5, %s6, %s7, %s8, %s9
  $region1: #{custom-call.2} parent=0
    #allocation0 [shape = 'u8[4096]{0}', space=vmem, size = 0x1000, scoped, tag = 'operand span for operand 0']
    #allocation1 [shape = 'u8[2048]{0}', space=vmem, size = 0x800, scoped, tag = 'packed  for operand 0']
    #allocation2 [shape = 'u8[4096]{0}', space=vmem, size = 0x1000, scoped, tag = 'operand span for operand 1']
    #allocation3 [shape = 'u8[2048]{0}', space=vmem, size = 0x800, scoped, tag = 'packed  for operand 1']
    #allocation4 [shape = 'u8[4096]{0}', space=vmem, size = 0x1000, scoped, tag = 'operand span for operand 2']
    #allocation5 [shape = 'u8[2048]{0}', space=vmem, size = 0x800, scoped, tag = 'packed  for operand 2']
    #allocation6 [shape = 'u8[4096]{0}', space=vmem, size = 0x1000, scoped, tag = 'operand span for operand 3']
    #allocation7 [shape = 'u8[2048]{0}', space=vmem, size = 0x800, scoped, tag = 'packed  for operand 3']
    #allocation8 [shape = 'u8[4096]{0}', space=vmem, size = 0x1000, scoped, tag = 'operand span for operand 4']
    #allocation9 [shape = 'u8[4096]{0}', space=vmem, size = 0x1000, scoped, tag = 'packed  for operand 4']
    #allocation10 [shape = 'u8[4096]{0}', space=vmem, size = 0x1000, scoped, tag = 'operand span for operand 5']
    #allocation11 [shape = 'u8[4096]{0}', space=vmem, size = 0x1000, scoped, tag = 'packed  for operand 5']
    #allocation12 [shape = 'u8[4096]{0}', space=vmem, size = 0x1000, scoped, tag = 'operand span for operand 6']
    #allocation13 [shape = 'u8[2048]{0}', space=vmem, size = 0x800, scoped, tag = 'packed  for operand 6']
    #allocation14 [shape = 'u8[4096]{0}', space=vmem, size = 0x1000, scoped, tag = 'operand span for operand 7']
    #allocation15 [shape = 'u8[2048]{0}', space=vmem, size = 0x800, scoped, tag = 'packed  for operand 7']
    #allocation16 [shape = 'u8[4096]{0}', space=vmem, size = 0x1000, scoped, tag = 'operand span for operand 8']
    #allocation17 [shape = 'u8[2048]{0}', space=vmem, size = 0x800, scoped, tag = 'packed  for operand 8']
    #allocation18 [shape = 'u8[4096]{0}', space=vmem, size = 0x1000, scoped, tag = 'operand span for operand 9']
    #allocation19 [shape = 'u8[2048]{0}', space=vmem, size = 0x800, scoped, tag = 'packed  for operand 9']
    loop: start=0, step=1, limit=6
    $region2: #{custom-call.2} parent=1 // loop_pre_header
      _
    $region3: #{custom-call.2} parent=1 // loop_header
      %s12 = sphi 0, %s16
      %p13 = scmp.ge.s32.totalorder %s12, 6
      %s24 = sphi 0, %s26
      %s27 = sphi 0, %s24
      %s28 = sphi 0, %s27
      %s44 = sphi 0, %s28
      %s52 = sphi 0, %s54
      %s55 = sphi 0, %s52
      %s56 = sphi 0, %s55
      %s72 = sphi 0, %s56
    $region4: #{custom-call.2} parent=1 // loop_header_branch
      %15 = sbr.rel (%p13) target = $region8
    $region5: #{custom-call.2} parent=1 // loop_body
      %s17 = ssub.s32 %s12, 1
      %s18 = ssub.s32 %s12, 2
      %s19 = sadd.s32 %s12, 1
      %s20 = sshrl.u32 %s12, 3
      %s21 = sshrl.u32 %s19, 3
      %s22 = ssub.s32 %s20, %s21
      %p23 = scmp.eq.s32.totalorder %s22, 0
      %s25 = sadd.s32 %s24, 1
      %s26 = scalar_select %p23, %s24, %s25
      %p29 = pneg %p23
      %p30 = scmp.eq.s32.totalorder %s12, 3
      %p31 = por %p29, %p30
      %p32 = scmp.ne.s32.totalorder %s24, %s27
      %p33 = scmp.eq.s32.totalorder %s12, 0
      %p34 = por %p32, %p33
      %p35 = scmp.ne.s32.totalorder %s24, %s27
      %p36 = scmp.eq.s32.totalorder %s17, 3
      %p37 = por %p35, %p36
      %p38 = scmp.ne.s32.totalorder %s27, %s28
      %p39 = scmp.eq.s32.totalorder %s17, 0
      %p40 = por %p38, %p39
      %p41 = scmp.ne.s32.totalorder %s27, %s28
      %p42 = scmp.eq.s32.totalorder %s18, 3
      %p43 = por %p41, %p42
      %p45 = scmp.ne.s32.totalorder %s28, %s44
      %p46 = scmp.eq.s32.totalorder %s18, 0
      %p47 = por %p45, %p46
      %s48 = sshrl.u32 %s12, 3
      %s49 = sshrl.u32 %s19, 3
      %s50 = ssub.s32 %s48, %s49
      %p51 = scmp.eq.s32.totalorder %s50, 0
      %s53 = sadd.s32 %s52, 1
      %s54 = scalar_select %p51, %s52, %s53
      %p57 = pneg %p51
      %p58 = scmp.eq.s32.totalorder %s12, 3
      %p59 = por %p57, %p58
      %p60 = scmp.ne.s32.totalorder %s52, %s55
      %p61 = scmp.eq.s32.totalorder %s12, 0
      %p62 = por %p60, %p61
      %p63 = scmp.ne.s32.totalorder %s52, %s55
      %p64 = scmp.eq.s32.totalorder %s17, 3
      %p65 = por %p63, %p64
      %p66 = scmp.ne.s32.totalorder %s55, %s56
      %p67 = scmp.eq.s32.totalorder %s17, 0
      %p68 = por %p66, %p67
      %p69 = scmp.ne.s32.totalorder %s55, %s56
      %p70 = scmp.eq.s32.totalorder %s18, 3
      %p71 = por %p69, %p70
      %p73 = scmp.ne.s32.totalorder %s56, %s72
      %p74 = scmp.eq.s32.totalorder %s18, 0
      %p75 = por %p73, %p74
      %p76 = scmp.le.s32.totalorder 1, %s12
      %p77 = scmp.lt.s32.totalorder %s12, 5
      %p78 = pnand %p76, %p77
      %p79 = pneg %p78
      // Predicated region
      $region9: #{custom-call.2} parent=5 // pred_check
        _
      $region10: #{custom-call.2} parent=5 // pred_check_branch
        %81 = sbr.rel (%p78) target = $region12
      $region11: #{custom-call.2} parent=5 // pred_region
        %s82 = ssub.s32 %s12, 1
      $region12: #{custom-call.2} parent=5 // pred_fallthru
        _
      %p83 = scmp.lt.s32.totalorder %s12, 4
      // Predicated region
      $region13: #{custom-call.2} parent=5 // pred_check
        %p84 = pneg %p83
      $region14: #{custom-call.2} parent=5 // pred_check_branch
        %86 = sbr.rel (%p84) target = $region16
      $region15: #{custom-call.2} parent=5 // pred_region
        %s87 = sand.u32 %s12, 1
        %s88 = sand.u32 %s12, 1
        %s89 = smul.addr %s88, 2
        %s90 = scalar_lea.vmem [#allocation1], %s89
        %s91 = smul.addr %s12, 2
        %s92 = scalar_lea.vmem %s0, %s91
        // Predicated region
        $region17: #{custom-call.2} parent=15 // pred_check
          _
        $region18: #{custom-call.2} parent=15 // pred_check_branch
          %94 = sbr.rel (0) target = $region20
        $region19: #{custom-call.2} parent=15 // pred_region
          // Predicated region
          $region21: #{custom-call.2} parent=19 // pred_check
            _
          $region22: #{custom-call.2} parent=19 // pred_check_branch
            %96 = sbr.rel target = $region24
          $region23: #{custom-call.2} parent=19 // pred_region
            // Predicated region
            $region36: #{custom-call.2} parent=23 // pred_check
              _
            $region37: #{custom-call.2} parent=23 // pred_check_branch
              %111 = sbr.rel (0) target = $region39
            $region38: #{custom-call.2} parent=23 // pred_region
              loop: start=0, step=1, limit=1
              $region40: #{custom-call.2} parent=38 // loop_pre_header
                _
              $region41: #{custom-call.2} parent=38 // loop_header
                %s114 = sphi 0, %s118
                %p115 = scmp.ge.s32.totalorder %s114, 1
                %s119 = sphi %s92, %s92
                %s120 = sphi %s90, %s90
              $region42: #{custom-call.2} parent=38 // loop_header_branch
                %117 = sbr.rel (%p115) target = $region46
              $region43: #{custom-call.2} parent=38 // loop_body
                %v121 = vld [vmem:[%s119] sm:$0x3]
                %122 = vst [vmem:[%s120] sm:$0x3] %v121
              $region44: #{custom-call.2} parent=38 // loop_footer
                %s118 = sadd.s32 1, %s114
              $region45: #{custom-call.2} parent=38 // loop_footer_branch
                %113 = sbr.rel target = $region41
              $region46: #{custom-call.2} parent=38 // loop_exit
                _
            $region39: #{custom-call.2} parent=23 // pred_fallthru
              _
          $region24: #{custom-call.2} parent=19 // pred_fallthru
            _
          // Predicated region
          $region25: #{custom-call.2} parent=19 // pred_check
            _
          $region26: #{custom-call.2} parent=19 // pred_check_branch
            %98 = sbr.rel (0) target = $region28
          $region27: #{custom-call.2} parent=19 // pred_region
            loop: start=0, step=1, limit=1
            $region29: #{custom-call.2} parent=27 // loop_pre_header
              _
            $region30: #{custom-call.2} parent=27 // loop_header
              %s101 = sphi 0, %s105
              %p102 = scmp.ge.s32.totalorder %s101, 1
              %s106 = sphi %s92, %s92
              %s107 = sphi %s90, %s90
            $region31: #{custom-call.2} parent=27 // loop_header_branch
              %104 = sbr.rel (%p102) target = $region35
            $region32: #{custom-call.2} parent=27 // loop_body
              %v108 = vld [vmem:[%s106] sm:$0x3]
              %109 = vst [vmem:[%s107] sm:$0x3] %v108
            $region33: #{custom-call.2} parent=27 // loop_footer
              %s105 = sadd.s32 1, %s101
            $region34: #{custom-call.2} parent=27 // loop_footer_branch
              %100 = sbr.rel target = $region30
            $region35: #{custom-call.2} parent=27 // loop_exit
              _
          $region28: #{custom-call.2} parent=19 // pred_fallthru
            _
        $region20: #{custom-call.2} parent=15 // pred_fallthru
          _
        %123 = vnop
        %s124 = sand.u32 %s12, 1
        %s125 = sand.u32 %s12, 1
        %s126 = smul.addr %s125, 2
        %s127 = scalar_lea.vmem [#allocation3], %s126
        %s128 = smul.addr %s12, 2
        %s129 = scalar_lea.vmem %s1, %s128
        // Predicated region
        $region47: #{custom-call.2} parent=15 // pred_check
          _
        $region48: #{custom-call.2} parent=15 // pred_check_branch
          %131 = sbr.rel (0) target = $region50
        $region49: #{custom-call.2} parent=15 // pred_region
          // Predicated region
          $region51: #{custom-call.2} parent=49 // pred_check
            _
          $region52: #{custom-call.2} parent=49 // pred_check_branch
            %133 = sbr.rel target = $region54
          $region53: #{custom-call.2} parent=49 // pred_region
            // Predicated region
            $region66: #{custom-call.2} parent=53 // pred_check
              _
            $region67: #{custom-call.2} parent=53 // pred_check_branch
              %148 = sbr.rel (0) target = $region69
            $region68: #{custom-call.2} parent=53 // pred_region
              loop: start=0, step=1, limit=1
              $region70: #{custom-call.2} parent=68 // loop_pre_header
                _
              $region71: #{custom-call.2} parent=68 // loop_header
                %s151 = sphi 0, %s155
                %p152 = scmp.ge.s32.totalorder %s151, 1
                %s156 = sphi %s129, %s129
                %s157 = sphi %s127, %s127
              $region72: #{custom-call.2} parent=68 // loop_header_branch
                %154 = sbr.rel (%p152) target = $region76
              $region73: #{custom-call.2} parent=68 // loop_body
                %v158 = vld [vmem:[%s156] sm:$0x3]
                %159 = vst [vmem:[%s157] sm:$0x3] %v158
              $region74: #{custom-call.2} parent=68 // loop_footer
                %s155 = sadd.s32 1, %s151
              $region75: #{custom-call.2} parent=68 // loop_footer_branch
                %150 = sbr.rel target = $region71
              $region76: #{custom-call.2} parent=68 // loop_exit
                _
            $region69: #{custom-call.2} parent=53 // pred_fallthru
              _
          $region54: #{custom-call.2} parent=49 // pred_fallthru
            _
          // Predicated region
          $region55: #{custom-call.2} parent=49 // pred_check
            _
          $region56: #{custom-call.2} parent=49 // pred_check_branch
            %135 = sbr.rel (0) target = $region58
          $region57: #{custom-call.2} parent=49 // pred_region
            loop: start=0, step=1, limit=1
            $region59: #{custom-call.2} parent=57 // loop_pre_header
              _
            $region60: #{custom-call.2} parent=57 // loop_header
              %s138 = sphi 0, %s142
              %p139 = scmp.ge.s32.totalorder %s138, 1
              %s143 = sphi %s129, %s129
              %s144 = sphi %s127, %s127
            $region61: #{custom-call.2} parent=57 // loop_header_branch
              %141 = sbr.rel (%p139) target = $region65
            $region62: #{custom-call.2} parent=57 // loop_body
              %v145 = vld [vmem:[%s143] sm:$0x3]
              %146 = vst [vmem:[%s144] sm:$0x3] %v145
            $region63: #{custom-call.2} parent=57 // loop_footer
              %s142 = sadd.s32 1, %s138
            $region64: #{custom-call.2} parent=57 // loop_footer_branch
              %137 = sbr.rel target = $region60
            $region65: #{custom-call.2} parent=57 // loop_exit
              _
          $region58: #{custom-call.2} parent=49 // pred_fallthru
            _
        $region50: #{custom-call.2} parent=15 // pred_fallthru
          _
        %160 = vnop
        %s161 = sand.u32 %s12, 1
        %s162 = sand.u32 %s12, 1
        %s163 = smul.addr %s162, 2
        %s164 = scalar_lea.vmem [#allocation5], %s163
        %s165 = smul.addr %s12, 2
        %s166 = scalar_lea.vmem %s2, %s165
        // Predicated region
        $region77: #{custom-call.2} parent=15 // pred_check
          _
        $region78: #{custom-call.2} parent=15 // pred_check_branch
          %168 = sbr.rel (0) target = $region80
        $region79: #{custom-call.2} parent=15 // pred_region
          // Predicated region
          $region81: #{custom-call.2} parent=79 // pred_check
            _
          $region82: #{custom-call.2} parent=79 // pred_check_branch
            %170 = sbr.rel target = $region84
          $region83: #{custom-call.2} parent=79 // pred_region
            // Predicated region
            $region96: #{custom-call.2} parent=83 // pred_check
              _
            $region97: #{custom-call.2} parent=83 // pred_check_branch
              %185 = sbr.rel (0) target = $region99
            $region98: #{custom-call.2} parent=83 // pred_region
              loop: start=0, step=1, limit=1
              $region100: #{custom-call.2} parent=98 // loop_pre_header
                _
              $region101: #{custom-call.2} parent=98 // loop_header
                %s188 = sphi 0, %s192
                %p189 = scmp.ge.s32.totalorder %s188, 1
                %s193 = sphi %s166, %s166
                %s194 = sphi %s164, %s164
              $region102: #{custom-call.2} parent=98 // loop_header_branch
                %191 = sbr.rel (%p189) target = $region106
              $region103: #{custom-call.2} parent=98 // loop_body
                %v195 = vld [vmem:[%s193] sm:$0x3]
                %196 = vst [vmem:[%s194] sm:$0x3] %v195
              $region104: #{custom-call.2} parent=98 // loop_footer
                %s192 = sadd.s32 1, %s188
              $region105: #{custom-call.2} parent=98 // loop_footer_branch
                %187 = sbr.rel target = $region101
              $region106: #{custom-call.2} parent=98 // loop_exit
                _
            $region99: #{custom-call.2} parent=83 // pred_fallthru
              _
          $region84: #{custom-call.2} parent=79 // pred_fallthru
            _
          // Predicated region
          $region85: #{custom-call.2} parent=79 // pred_check
            _
          $region86: #{custom-call.2} parent=79 // pred_check_branch
            %172 = sbr.rel (0) target = $region88
          $region87: #{custom-call.2} parent=79 // pred_region
            loop: start=0, step=1, limit=1
            $region89: #{custom-call.2} parent=87 // loop_pre_header
              _
            $region90: #{custom-call.2} parent=87 // loop_header
              %s175 = sphi 0, %s179
              %p176 = scmp.ge.s32.totalorder %s175, 1
              %s180 = sphi %s166, %s166
              %s181 = sphi %s164, %s164
            $region91: #{custom-call.2} parent=87 // loop_header_branch
              %178 = sbr.rel (%p176) target = $region95
            $region92: #{custom-call.2} parent=87 // loop_body
              %v182 = vld [vmem:[%s180] sm:$0x3]
              %183 = vst [vmem:[%s181] sm:$0x3] %v182
            $region93: #{custom-call.2} parent=87 // loop_footer
              %s179 = sadd.s32 1, %s175
            $region94: #{custom-call.2} parent=87 // loop_footer_branch
              %174 = sbr.rel target = $region90
            $region95: #{custom-call.2} parent=87 // loop_exit
              _
          $region88: #{custom-call.2} parent=79 // pred_fallthru
            _
        $region80: #{custom-call.2} parent=15 // pred_fallthru
          _
        %197 = vnop
        %s198 = sand.u32 %s12, 1
        %s199 = sand.u32 %s12, 1
        %s200 = smul.addr %s199, 2
        %s201 = scalar_lea.vmem [#allocation7], %s200
        %s202 = smul.addr %s12, 2
        %s203 = scalar_lea.vmem %s3, %s202
        // Predicated region
        $region107: #{custom-call.2} parent=15 // pred_check
          _
        $region108: #{custom-call.2} parent=15 // pred_check_branch
          %205 = sbr.rel (0) target = $region110
        $region109: #{custom-call.2} parent=15 // pred_region
          // Predicated region
          $region111: #{custom-call.2} parent=109 // pred_check
            _
          $region112: #{custom-call.2} parent=109 // pred_check_branch
            %207 = sbr.rel target = $region114
          $region113: #{custom-call.2} parent=109 // pred_region
            // Predicated region
            $region126: #{custom-call.2} parent=113 // pred_check
              _
            $region127: #{custom-call.2} parent=113 // pred_check_branch
              %222 = sbr.rel (0) target = $region129
            $region128: #{custom-call.2} parent=113 // pred_region
              loop: start=0, step=1, limit=1
              $region130: #{custom-call.2} parent=128 // loop_pre_header
                _
              $region131: #{custom-call.2} parent=128 // loop_header
                %s225 = sphi 0, %s229
                %p226 = scmp.ge.s32.totalorder %s225, 1
                %s230 = sphi %s203, %s203
                %s231 = sphi %s201, %s201
              $region132: #{custom-call.2} parent=128 // loop_header_branch
                %228 = sbr.rel (%p226) target = $region136
              $region133: #{custom-call.2} parent=128 // loop_body
                %v232 = vld [vmem:[%s230] sm:$0x3]
                %233 = vst [vmem:[%s231] sm:$0x3] %v232
              $region134: #{custom-call.2} parent=128 // loop_footer
                %s229 = sadd.s32 1, %s225
              $region135: #{custom-call.2} parent=128 // loop_footer_branch
                %224 = sbr.rel target = $region131
              $region136: #{custom-call.2} parent=128 // loop_exit
                _
            $region129: #{custom-call.2} parent=113 // pred_fallthru
              _
          $region114: #{custom-call.2} parent=109 // pred_fallthru
            _
          // Predicated region
          $region115: #{custom-call.2} parent=109 // pred_check
            _
          $region116: #{custom-call.2} parent=109 // pred_check_branch
            %209 = sbr.rel (0) target = $region118
          $region117: #{custom-call.2} parent=109 // pred_region
            loop: start=0, step=1, limit=1
            $region119: #{custom-call.2} parent=117 // loop_pre_header
              _
            $region120: #{custom-call.2} parent=117 // loop_header
              %s212 = sphi 0, %s216
              %p213 = scmp.ge.s32.totalorder %s212, 1
              %s217 = sphi %s203, %s203
              %s218 = sphi %s201, %s201
            $region121: #{custom-call.2} parent=117 // loop_header_branch
              %215 = sbr.rel (%p213) target = $region125
            $region122: #{custom-call.2} parent=117 // loop_body
              %v219 = vld [vmem:[%s217] sm:$0x3]
              %220 = vst [vmem:[%s218] sm:$0x3] %v219
            $region123: #{custom-call.2} parent=117 // loop_footer
              %s216 = sadd.s32 1, %s212
            $region124: #{custom-call.2} parent=117 // loop_footer_branch
              %211 = sbr.rel target = $region120
            $region125: #{custom-call.2} parent=117 // loop_exit
              _
          $region118: #{custom-call.2} parent=109 // pred_fallthru
            _
        $region110: #{custom-call.2} parent=15 // pred_fallthru
          _
        %234 = vnop
      $region16: #{custom-call.2} parent=5 // pred_fallthru
        _
      %p235 = scmp.le.s32.totalorder 1, %s12
      %p236 = scmp.lt.s32.totalorder %s12, 5
      %p237 = pnand %p235, %p236
      %p238 = pneg %p237
      // Predicated region
      $region137: #{custom-call.2} parent=5 // pred_check
        _
      $region138: #{custom-call.2} parent=5 // pred_check_branch
        %240 = sbr.rel (%p237) target = $region140
      $region139: #{custom-call.2} parent=5 // pred_region
        #allocation20 [shape = 'f32[2,2]{1,0}', space=vmem, size = 0x1000, scoped, tag = 'a top-left matrix']
        #allocation21 [shape = 'f32[2,2]{1,0}', space=vmem, size = 0x1000, scoped, tag = 'a top-right matrix']
        #allocation22 [shape = 'f32[2,2]{1,0}', space=vmem, size = 0x1000, scoped, tag = 'a bottom-left matrix']
        #allocation23 [shape = 'f32[2,2]{1,0}', space=vmem, size = 0x1000, scoped, tag = 'a bottom-right matrix']
        %s241 = ssub.s32 %s12, 1
        %s242 = sand.u32 %s17, 1
        %s243 = sand.u32 %s17, 1
        %s244 = smul.addr %s243, 2
        %s245 = scalar_lea.vmem [#allocation1], %s244
        %s246 = sand.u32 %s17, 1
        %s247 = sand.u32 %s17, 1
        %s248 = smul.addr %s247, 2
        %s249 = scalar_lea.vmem [#allocation3], %s248
        %s250 = sand.u32 %s17, 1
        %s251 = sand.u32 %s17, 1
        %s252 = smul.addr %s251, 2
        %s253 = scalar_lea.vmem [#allocation5], %s252
        %s254 = sand.u32 %s17, 1
        %s255 = sand.u32 %s17, 1
        %s256 = smul.addr %s255, 2
        %s257 = scalar_lea.vmem [#allocation7], %s256
        %s258 = sand.u32 %s17, 1
        %s259 = sand.u32 %s17, 1
        %s260 = smul.addr %s259, 2
        %s261 = scalar_lea.vmem [#allocation1], %s260
        %s262 = sand.u32 %s17, 1
        %s263 = sand.u32 %s17, 1
        %s264 = smul.addr %s263, 2
        %s265 = scalar_lea.vmem [#allocation3], %s264
        %s266 = sand.u32 %s17, 1
        %s267 = sand.u32 %s17, 1
        %s268 = smul.addr %s267, 2
        %s269 = scalar_lea.vmem [#allocation5], %s268
        %s270 = sand.u32 %s17, 1
        %s271 = sand.u32 %s17, 1
        %s272 = smul.addr %s271, 2
        %s273 = scalar_lea.vmem [#allocation7], %s272
        %p274 = pneg %p40
        %p275 = pneg %p37
        %s276 = sand.u32 %s27, 1
        %s277 = sand.u32 %s27, 1
        %s278 = smul.addr %s277, 4
        %s279 = scalar_lea.vmem [#allocation9], %s278
        %p280 = pneg %p68
        %p281 = pneg %p65
        %s282 = sand.u32 %s55, 1
        %s283 = sand.u32 %s55, 1
        %s284 = smul.addr %s283, 4
        %s285 = scalar_lea.vmem [#allocation11], %s284
        %s286 = sand.u32 %s17, 1
        %s287 = sand.u32 %s17, 1
        %s288 = smul.addr %s287, 2
        %s289 = scalar_lea.vmem [#allocation13], %s288
        %s290 = sand.u32 %s17, 1
        %s291 = sand.u32 %s17, 1
        %s292 = smul.addr %s291, 2
        %s293 = scalar_lea.vmem [#allocation15], %s292
        %s294 = sand.u32 %s17, 1
        %s295 = sand.u32 %s17, 1
        %s296 = smul.addr %s295, 2
        %s297 = scalar_lea.vmem [#allocation17], %s296
        %s298 = sand.u32 %s17, 1
        %s299 = sand.u32 %s17, 1
        %s300 = smul.addr %s299, 2
        %s301 = scalar_lea.vmem [#allocation19], %s300
        %s303 = sshllo.u32 0, 2
        %v304 = vld [vmem:[%s261] sm:%s303]
        %305 = vst [vmem:[#allocation0] sm:%s303] %v304
        %s307 = sshllo.u32 0, 2
        %v308 = vld [vmem:[%s265] sm:%s307]
        %309 = vst [vmem:[#allocation2] sm:%s307] %v308
        %s311 = sshllo.u32 0, 2
        %v312 = vld [vmem:[%s269] sm:%s311]
        %313 = vst [vmem:[#allocation4] sm:%s311] %v312
        %s315 = sshllo.u32 0, 2
        %v316 = vld [vmem:[%s273] sm:%s315]
        %317 = vst [vmem:[#allocation6] sm:%s315] %v316
        %s318 = sshrl.u32 %s17, 3
        %s319 = sshrl.u32 %s17, 3
        %s320 = smov [#allocation20]
        %v321 = vld [vmem:[#allocation0] sm:$0xff]
        %322 = vst [vmem:[%s320] sm:$0xff] %v321
        %s323 = smov [#allocation21]
        %v324 = vld [vmem:[#allocation2] sm:$0xff]
        %325 = vst [vmem:[%s323] sm:$0xff] %v324
        %s326 = smov [#allocation22]
        %v327 = vld [vmem:[#allocation4] sm:$0xff]
        %328 = vst [vmem:[%s326] sm:$0xff] %v327
        %s329 = smov [#allocation23]
        %v330 = vld [vmem:[#allocation6] sm:$0xff]
        %331 = vst [vmem:[%s329] sm:$0xff] %v330
        %332 = vst [vmem:[#allocation12] sm:$0xff] 0.0
        %333 = vst [vmem:[#allocation14] sm:$0xff] 0.0
        %334 = vst [vmem:[#allocation16] sm:$0xff] 0.0
        %335 = vst [vmem:[#allocation18] sm:$0xff] 0.0
        %s336 = smov [#allocation12]
        %v337 = vlaneseq
        %v338 = vand.u32 %v337, 127
        %v339 = vmov %v338
        %v340 = vlaneseq
        %v341 = vshrl.u32 %v340, 7
        %v342 = vmov %v341
        %v343 = vld [vmem:[%s336] sm:$0x3]
        %vm346 = vcmp.eq.s32.totalorder %v342, %v339
        %v347 = vsel %vm346, 1.0, %v343
        %348 = vst [vmem:[%s336] sm:$0x3] %v347
        %s349 = smov [#allocation18]
        %v350 = vlaneseq
        %v351 = vand.u32 %v350, 127
        %v352 = vmov %v351
        %v353 = vlaneseq
        %v354 = vshrl.u32 %v353, 7
        %v355 = vmov %v354
        %v356 = vld [vmem:[%s349] sm:$0x3]
        %vm359 = vcmp.eq.s32.totalorder %v355, %v352
        %v360 = vsel %vm359, 1.0, %v356
        %361 = vst [vmem:[%s349] sm:$0x3] %v360
        // While loop
        $region141: #{custom-call.2} parent=139 // loop_pre_header
          _
        $region142: #{custom-call.2} parent=139 // loop_header
          %s363 = sphi 0, %s905
          %v364 = vlaneseq
          %v365 = vand.u32 %v364, 127
          %v366 = vmov %v365
          %v367 = vlaneseq
          %v368 = vshrl.u32 %v367, 7
          %v369 = vmov %v368
          %s370 = smov [#allocation20]
          %v371 = vlaneseq
          %v372 = vand.u32 %v371, 127
          %vm373 = vcmp.ge.s32.totalorder %v372, 0
          %vm374 = vcmp.lt.s32.totalorder %v372, 2
          %vm375 = vmand %vm373, %vm374
          %v376 = vld [vmem:[%s370] sm:$0x3]
          %v377 = vsel %vm375, %v376, 0.0
          %v378 = vmul.f32 %v377, %v377
          %vm381 = vcmp.eq.s32.totalorder %v369, %v366
          %v382 = vsel %vm381, 0.0, %v378
          %v383 = vlaneseq
          %v384 = vand.u32 %v383, 127
          %v385 = vmov %v384
          %v386 = vlaneseq
          %v387 = vshrl.u32 %v386, 7
          %v388 = vmov %v387
          %s389 = smov [#allocation21]
          %v390 = vlaneseq
          %v391 = vand.u32 %v390, 127
          %vm392 = vcmp.ge.s32.totalorder %v391, 0
          %vm393 = vcmp.lt.s32.totalorder %v391, 2
          %vm394 = vmand %vm392, %vm393
          %v395 = vld [vmem:[%s389] sm:$0x3]
          %v396 = vsel %vm394, %v395, 0.0
          %v397 = vmul.f32 %v396, %v396
          %v398 = vadd.f32 %v382, %v397
          %v399 = vadd.f32 %v378, %v397
          %v400 = vlaneseq
          %v401 = vand.u32 %v400, 127
          %v402 = vmov %v401
          %v403 = vlaneseq
          %v404 = vshrl.u32 %v403, 7
          %v405 = vmov %v404
          %s406 = smov [#allocation22]
          %v407 = vlaneseq
          %v408 = vand.u32 %v407, 127
          %vm409 = vcmp.ge.s32.totalorder %v408, 0
          %vm410 = vcmp.lt.s32.totalorder %v408, 2
          %vm411 = vmand %vm409, %vm410
          %v412 = vld [vmem:[%s406] sm:$0x3]
          %v413 = vsel %vm411, %v412, 0.0
          %v414 = vmul.f32 %v413, %v413
          %v415 = vadd.f32 %v398, %v414
          %v416 = vadd.f32 %v399, %v414
          %v417 = vlaneseq
          %v418 = vand.u32 %v417, 127
          %v419 = vmov %v418
          %v420 = vlaneseq
          %v421 = vshrl.u32 %v420, 7
          %v422 = vmov %v421
          %s423 = smov [#allocation23]
          %v424 = vlaneseq
          %v425 = vand.u32 %v424, 127
          %vm426 = vcmp.ge.s32.totalorder %v425, 0
          %vm427 = vcmp.lt.s32.totalorder %v425, 2
          %vm428 = vmand %vm426, %vm427
          %v429 = vld [vmem:[%s423] sm:$0x3]
          %v430 = vsel %vm428, %v429, 0.0
          %v431 = vmul.f32 %v430, %v430
          %vm434 = vcmp.eq.s32.totalorder %v422, %v419
          %v435 = vsel %vm434, 0.0, %v431
          %v436 = vadd.f32 %v415, %v435
          %v437 = vadd.f32 %v416, %v431
          %438 = vadd.xlane.f32.xlu0 %v437
          %v439 = vpop.xlane.xlu0 %438
          %v440 = vrot.slane %v439, 4
          %v441 = vadd.f32 %v439, %v440
          %v442 = vrot.slane %v441, 2
          %v443 = vadd.f32 %v441, %v442
          %v444 = vrot.slane %v443, 1
          %v445 = vadd.f32 %v443, %v444
          %446 = vadd.xlane.f32.xlu0 %v436
          %v447 = vpop.xlane.xlu0 %446
          %v448 = vrot.slane %v447, 4
          %v449 = vadd.f32 %v447, %v448
          %v450 = vrot.slane %v449, 2
          %v451 = vadd.f32 %v449, %v450
          %v452 = vrot.slane %v451, 1
          %v453 = vadd.f32 %v451, %v452
          %s454 = vtos %v453
          %s455 = vtos %v445
          %s456 = smul.f32 1e-10, %s455
          %p457 = scmp.le.f32.partialorder %s454, %s456
          %p458 = scmp.ge.s32.totalorder %s363, 15
          %p459 = por %p457, %p458
        $region143: #{custom-call.2} parent=139 // loop_header_branch
          %907 = sbr.rel (%p459) target = $region147
        $region144: #{custom-call.2} parent=139 // loop_body
          loop: start=0, step=1, limit=3
          $region148: #{custom-call.2} parent=144 // loop_pre_header
            _
          $region149: #{custom-call.2} parent=144 // loop_header
            %s461 = sphi 0, %s465
            %p462 = scmp.ge.s32.totalorder %s461, 3
          $region150: #{custom-call.2} parent=144 // loop_header_branch
            %464 = sbr.rel (%p462) target = $region154
          $region151: #{custom-call.2} parent=144 // loop_body
            #allocation24 [shape = 'f32[1024]{0}', space=vmem, size = 0x1000, scoped, tag = 'a_tl_diag vmem']
            #allocation25 [shape = 'f32[1024]{0}', space=vmem, size = 0x1000, scoped, tag = 'a_tr_diag vmem']
            #allocation26 [shape = 'f32[1024]{0}', space=vmem, size = 0x1000, scoped, tag = 'a_br_diag vmem']
            #allocation27 [shape = 'f32[1024]{0}', space=vmem, size = 0x1000, scoped, tag = 'rt1 vmem']
            #allocation28 [shape = 'f32[1024]{0}', space=vmem, size = 0x1000, scoped, tag = 'rt2 vmem']
            #allocation29 [shape = 'f32[1024]{0}', space=vmem, size = 0x1000, scoped, tag = 'c vmem']
            #allocation30 [shape = 'f32[1024]{0}', space=vmem, size = 0x1000, scoped, tag = 's vmem']
            #allocation31 [shape = 'f32[4096]{0}', space=vmem, size = 0x4000, scoped, tag = 'c broadcast']
            #allocation32 [shape = 'f32[4096]{0}', space=vmem, size = 0x4000, scoped, tag = 's broadcast']
            %s466 = smov [#allocation20]
            %s467 = smov [#allocation24]
            %v468 = vlaneseq
            %v469 = vand.u32 %v468, 127
            %v470 = vmov %v469
            %v471 = vlaneseq
            %v472 = vshrl.u32 %v471, 7
            %v473 = vmov %v472
            %v474 = vld [vmem:[%s466] sm:$0x3]
            %vm477 = vcmp.eq.s32.totalorder %v473, %v470
            %v478 = vsel %vm477, %v474, 0.0
            %v479 = vrot.slane %v478, 4
            %v480 = vadd.f32 %v478, %v479
            %v481 = vrot.slane %v480, 2
            %v482 = vadd.f32 %v480, %v481
            %v483 = vrot.slane %v482, 1
            %v484 = vadd.f32 %v482, %v483
            %485 = vst [vmem:[%s467] sm:$0x1] %v484
            %s486 = smov [#allocation21]
            %s487 = smov [#allocation25]
            %v488 = vlaneseq
            %v489 = vand.u32 %v488, 127
            %v490 = vmov %v489
            %v491 = vlaneseq
            %v492 = vshrl.u32 %v491, 7
            %v493 = vmov %v492
            %v494 = vld [vmem:[%s486] sm:$0x3]
            %vm497 = vcmp.eq.s32.totalorder %v493, %v490
            %v498 = vsel %vm497, %v494, 0.0
            %v499 = vrot.slane %v498, 4
            %v500 = vadd.f32 %v498, %v499
            %v501 = vrot.slane %v500, 2
            %v502 = vadd.f32 %v500, %v501
            %v503 = vrot.slane %v502, 1
            %v504 = vadd.f32 %v502, %v503
            %505 = vst [vmem:[%s487] sm:$0x1] %v504
            %s506 = smov [#allocation23]
            %s507 = smov [#allocation26]
            %v508 = vlaneseq
            %v509 = vand.u32 %v508, 127
            %v510 = vmov %v509
            %v511 = vlaneseq
            %v512 = vshrl.u32 %v511, 7
            %v513 = vmov %v512
            %v514 = vld [vmem:[%s506] sm:$0x3]
            %vm517 = vcmp.eq.s32.totalorder %v513, %v510
            %v518 = vsel %vm517, %v514, 0.0
            %v519 = vrot.slane %v518, 4
            %v520 = vadd.f32 %v518, %v519
            %v521 = vrot.slane %v520, 2
            %v522 = vadd.f32 %v520, %v521
            %v523 = vrot.slane %v522, 1
            %v524 = vadd.f32 %v522, %v523
            %525 = vst [vmem:[%s507] sm:$0x1] %v524
            %s526 = smov [#allocation29]
            %s527 = smov [#allocation30]
            %s528 = smov [#allocation24]
            %v529 = vld [vmem:[%s528] sm:$0xff]
            %s530 = smov [#allocation25]
            %v531 = vld [vmem:[%s530] sm:$0xff]
            %s532 = smov [#allocation26]
            %v533 = vld [vmem:[%s532] sm:$0xff]
            %v534 = vsub.f32 %v533, %v529
            %v535 = vmul.f32 2.0, %v531
            %v536 = vrcp.pop %v535
            %v537 = vmul.f32 %v534, %v536
            %vm538 = vcmp.ge.f32.partialorder %v537, 0.0
            %v539 = vmul.f32 %v537, %v537
            %v540 = vadd.f32 1.0, %v539
            %v541 = vrsqrt.pop %v540
            %v542 = vmul.f32 %v540, %v541
            %vm543 = vcmp.eq.f32.partialorder %v540, inf
            %v544 = vsel %vm543, %v540, %v542
            %vm545 = vcmp.eq.f32.partialorder %v540, 0.0
            %v546 = vand.u32 %v540, 2147483648
            %v547 = vsel %vm545, %v546, %v544
            %v548 = vxor.u32 %v547, 2147483648
            %v549 = vsel %vm538, %v547, %v548
            %v550 = vadd.f32 %v537, %v549
            %v551 = vrcp.pop %v550
            %v552 = vand.u32 2147483647, %v529
            %v553 = vand.u32 2147483647, %v531
            %v554 = vand.u32 2147483647, %v533
            %v555 = vmin.f32 %v552, %v554
            %v556 = vmul.f32 1.1920929e-08, %v555
            %vm557 = vcmp.le.f32.partialorder %v553, %v556
            %v558 = vsel %vm557, 0.0, %v551
            %v559 = vmul.f32 %v558, %v558
            %v560 = vadd.f32 1.0, %v559
            %v561 = vrsqrt.pop %v560
            %v562 = vmul.f32 %v558, %v561
            %v563 = vmul.f32 %v558, %v531
            %v564 = vsub.f32 %v529, %v563
            %v565 = vmul.f32 %v558, %v531
            %v566 = vadd.f32 %v533, %v565
            %s567 = smov [#allocation27]
            %568 = vst [vmem:[%s567] sm:$0xff] %v564
            %s569 = smov [#allocation28]
            %570 = vst [vmem:[%s569] sm:$0xff] %v566
            %s571 = smov %s526
            %572 = vst [vmem:[%s571] sm:$0xff] %v561
            %s573 = smov %s527
            %574 = vst [vmem:[%s573] sm:$0xff] %v562
            %s575 = smov [#allocation29]
            %v576 = vld [vmem:[%s575] ss:$0 sm:$0xff]
            %v577 = vlaneseq
            %v578 = vand.u32 %v577, 127
            %v579 = vmov %v578
            %v580 = vlaneseq
            %v581 = vshrl.u32 %v580, 7
            %v582 = vmov %v581
            %vm584 = vcmp.eq.s32.totalorder %v582, %v579
            %v585 = vsel %vm584, %v576, 0.0
            %586 = vadd.xlane.f32.xlu0 %v585
            %v587 = vpop.xlane.xlu0 %586
            %s588 = smov [#allocation31]
            %589 = vst [vmem:[%s588] sm:$0xff] %v587
            %s590 = smov [#allocation30]
            %v591 = vld [vmem:[%s590] ss:$0 sm:$0xff]
            %v592 = vlaneseq
            %v593 = vand.u32 %v592, 127
            %v594 = vmov %v593
            %v595 = vlaneseq
            %v596 = vshrl.u32 %v595, 7
            %v597 = vmov %v596
            %vm599 = vcmp.eq.s32.totalorder %v597, %v594
            %v600 = vsel %vm599, %v591, 0.0
            %601 = vadd.xlane.f32.xlu0 %v600
            %v602 = vpop.xlane.xlu0 %601
            %s603 = smov [#allocation32]
            %604 = vst [vmem:[%s603] sm:$0xff] %v602
            %s605 = smov [#allocation31]
            %v606 = vld [vmem:[%s605] sm:$0xff]
            %s607 = smov [#allocation32]
            %v608 = vld [vmem:[%s607] sm:$0xff]
            %s609 = smov [#allocation20]
            %s610 = smov [#allocation21]
            %s611 = smov [#allocation22]
            %s612 = smov [#allocation23]
            %v613 = vld [vmem:[%s609] sm:$0x3]
            %v614 = vld [vmem:[%s610] sm:$0x3]
            %v615 = vld [vmem:[%s611] sm:$0x3]
            %v616 = vld [vmem:[%s612] sm:$0x3]
            %v617 = vmul.f32 %v606, %v613
            %v618 = vmul.f32 %v608, %v615
            %v619 = vsub.f32 %v617, %v618
            %v620 = vmul.f32 %v606, %v614
            %v621 = vmul.f32 %v608, %v616
            %v622 = vsub.f32 %v620, %v621
            %v623 = vmul.f32 %v608, %v613
            %v624 = vmul.f32 %v606, %v615
            %v625 = vadd.f32 %v623, %v624
            %v626 = vmul.f32 %v608, %v614
            %v627 = vmul.f32 %v606, %v616
            %v628 = vadd.f32 %v626, %v627
            %629 = vst [vmem:[%s609] sm:$0x3] %v619
            %630 = vst [vmem:[%s610] sm:$0x3] %v622
            %631 = vst [vmem:[%s611] sm:$0x3] %v625
            %632 = vst [vmem:[%s612] sm:$0x3] %v628
            %s633 = smov [#allocation29]
            %v634 = vld [vmem:[%s633] ss:$0 sm:$0xff]
            %s635 = smov [#allocation30]
            %v636 = vld [vmem:[%s635] ss:$0 sm:$0xff]
            %s637 = smov [#allocation20]
            %s638 = smov [#allocation21]
            %s639 = smov [#allocation22]
            %s640 = smov [#allocation23]
            %v641 = vld [vmem:[%s637] sm:$0x3]
            %v642 = vld [vmem:[%s638] sm:$0x3]
            %v643 = vld [vmem:[%s639] sm:$0x3]
            %v644 = vld [vmem:[%s640] sm:$0x3]
            %v645 = vmul.f32 %v634, %v641
            %v646 = vmul.f32 %v636, %v642
            %v647 = vsub.f32 %v645, %v646
            %v648 = vmul.f32 %v636, %v641
            %v649 = vmul.f32 %v634, %v642
            %v650 = vadd.f32 %v648, %v649
            %v651 = vmul.f32 %v634, %v643
            %v652 = vmul.f32 %v636, %v644
            %v653 = vsub.f32 %v651, %v652
            %v654 = vmul.f32 %v636, %v643
            %v655 = vmul.f32 %v634, %v644
            %v656 = vadd.f32 %v654, %v655
            %657 = vst [vmem:[%s637] sm:$0x3] %v647
            %658 = vst [vmem:[%s638] sm:$0x3] %v650
            %659 = vst [vmem:[%s639] sm:$0x3] %v653
            %660 = vst [vmem:[%s640] sm:$0x3] %v656
            %s661 = smov [#allocation20]
            %s662 = smov [#allocation27]
            %v663 = vlaneseq
            %v664 = vand.u32 %v663, 127
            %v665 = vmov %v664
            %v666 = vlaneseq
            %v667 = vshrl.u32 %v666, 7
            %v668 = vmov %v667
            %v669 = vld [vmem:[%s662] ss:$0 sm:$0xff]
            %v670 = vld [vmem:[%s661] sm:$0x3]
            %vm673 = vcmp.eq.s32.totalorder %v668, %v665
            %v674 = vsel %vm673, %v669, %v670
            %675 = vst [vmem:[%s661] sm:$0x3] %v674
            %s676 = smov [#allocation21]
            %v677 = vlaneseq
            %v678 = vand.u32 %v677, 127
            %v679 = vmov %v678
            %v680 = vlaneseq
            %v681 = vshrl.u32 %v680, 7
            %v682 = vmov %v681
            %v683 = vld [vmem:[%s676] sm:$0x3]
            %vm686 = vcmp.eq.s32.totalorder %v682, %v679
            %v687 = vsel %vm686, 0.0, %v683
            %688 = vst [vmem:[%s676] sm:$0x3] %v687
            %s689 = smov [#allocation22]
            %v690 = vlaneseq
            %v691 = vand.u32 %v690, 127
            %v692 = vmov %v691
            %v693 = vlaneseq
            %v694 = vshrl.u32 %v693, 7
            %v695 = vmov %v694
            %v696 = vld [vmem:[%s689] sm:$0x3]
            %vm699 = vcmp.eq.s32.totalorder %v695, %v692
            %v700 = vsel %vm699, 0.0, %v696
            %701 = vst [vmem:[%s689] sm:$0x3] %v700
            %s702 = smov [#allocation23]
            %s703 = smov [#allocation28]
            %v704 = vlaneseq
            %v705 = vand.u32 %v704, 127
            %v706 = vmov %v705
            %v707 = vlaneseq
            %v708 = vshrl.u32 %v707, 7
            %v709 = vmov %v708
            %v710 = vld [vmem:[%s703] ss:$0 sm:$0xff]
            %v711 = vld [vmem:[%s702] sm:$0x3]
            %vm714 = vcmp.eq.s32.totalorder %v709, %v706
            %v715 = vsel %vm714, %v710, %v711
            %716 = vst [vmem:[%s702] sm:$0x3] %v715
            %s717 = smov [#allocation20]
            %s718 = smov [#allocation21]
            %v719 = vld [vmem:[%s718] sm:$0x3]
            %720 = vrot.lane.b32.xlu0 %v719, 1
            %v721 = vpop.permute.xlu0 %720
            %v722 = vld [vmem:[%s717] sm:$0x3]
            %v723 = vld [vmem:[%s717] sm:$0x3]
            %724 = vrot.lane.b32.xlu0 %v723, 1
            %v725 = vpop.permute.xlu0 %724
            %v726 = vlaneseq
            %v727 = vand.u32 %v726, 127
            %vm728 = vcmp.eq.s32.totalorder %v727, 0
            %v729 = vsel %vm728, %v723, %v725
            %v730 = vlaneseq
            %v731 = vand.u32 %v730, 127
            %vm732 = vcmp.eq.s32.totalorder %v731, 1
            %v733 = vsel %vm732, %v721, %v729
            %v734 = vlaneseq
            %v735 = vand.u32 %v734, 127
            %vm736 = vcmp.ge.s32.totalorder %v735, 0
            %vm737 = vcmp.lt.s32.totalorder %v735, 2
            %vm738 = vmand %vm736, %vm737
            %v739 = vsel %vm738, %v733, 0.0
            %v740 = vld [vmem:[%s718] sm:$0x3]
            %741 = vrot.lane.b32.xlu0 %v740, 127
            %v742 = vpop.permute.xlu0 %741
            %v743 = vlaneseq
            %v744 = vand.u32 %v743, 127
            %vm745 = vcmp.eq.s32.totalorder %v744, 1
            %v746 = vsel %vm745, %v722, %v742
            %747 = vst [vmem:[%s717] sm:$0x3] %v739
            %748 = vst [vmem:[%s718] sm:$0x3] %v746
            %s749 = smov [#allocation22]
            %s750 = smov [#allocation23]
            %v751 = vld [vmem:[%s750] sm:$0x3]
            %752 = vrot.lane.b32.xlu0 %v751, 1
            %v753 = vpop.permute.xlu0 %752
            %v754 = vld [vmem:[%s749] sm:$0x3]
            %v755 = vld [vmem:[%s749] sm:$0x3]
            %756 = vrot.lane.b32.xlu0 %v755, 1
            %v757 = vpop.permute.xlu0 %756
            %v758 = vlaneseq
            %v759 = vand.u32 %v758, 127
            %vm760 = vcmp.eq.s32.totalorder %v759, 0
            %v761 = vsel %vm760, %v755, %v757
            %v762 = vlaneseq
            %v763 = vand.u32 %v762, 127
            %vm764 = vcmp.eq.s32.totalorder %v763, 1
            %v765 = vsel %vm764, %v753, %v761
            %v766 = vlaneseq
            %v767 = vand.u32 %v766, 127
            %vm768 = vcmp.ge.s32.totalorder %v767, 0
            %vm769 = vcmp.lt.s32.totalorder %v767, 2
            %vm770 = vmand %vm768, %vm769
            %v771 = vsel %vm770, %v765, 0.0
            %v772 = vld [vmem:[%s750] sm:$0x3]
            %773 = vrot.lane.b32.xlu0 %v772, 127
            %v774 = vpop.permute.xlu0 %773
            %v775 = vlaneseq
            %v776 = vand.u32 %v775, 127
            %vm777 = vcmp.eq.s32.totalorder %v776, 1
            %v778 = vsel %vm777, %v754, %v774
            %779 = vst [vmem:[%s749] sm:$0x3] %v771
            %780 = vst [vmem:[%s750] sm:$0x3] %v778
            %s781 = smov [#allocation20]
            %s782 = smov [#allocation22]
            %v783 = vld [vmem:[%s781] ss:$0 sm:$0xff]
            %s785 = scalar_lea.vmem %s781, 4294967295
            %v786 = vld [vmem:[%s785] sm:$0x2]
            %v787 = vlaneseq
            %v788 = vshrl.u32 %v787, 7
            %vm789 = vcmp.eq.s32.totalorder %v788, 0
            %v790 = vsel %vm789, %v783, %v786
            %s791 = scalar_lea.vmem %s781, 1
            %v792 = vld [vmem:[%s791] ss:$0 sm:$0xff]
            %793 = vst [vmem:[%s781] sm:$0x3] %v790
            %v794 = vld [vmem:[%s782] ss:$0 sm:$0xff]
            %s795 = scalar_lea.vmem %s781, 1
            %796 = vst [vmem:[%s795] sm:$0x1] %v794
            %s797 = scalar_lea.vmem %s782, 1
            %v798 = vld [vmem:[%s797] sm:$0x1]
            %v799 = vlaneseq
            %v800 = vshrl.u32 %v799, 7
            %vm801 = vcmp.eq.s32.totalorder %v800, 1
            %v802 = vsel %vm801, %v792, %v798
            %v803 = vld [vmem:[%s782] ss:$0 sm:$0xff]
            %804 = vst [vmem:[%s782] sm:$0x3] %v802
            %s805 = smov [#allocation21]
            %s806 = smov [#allocation23]
            %v807 = vld [vmem:[%s805] ss:$0 sm:$0xff]
            %s809 = scalar_lea.vmem %s805, 4294967295
            %v810 = vld [vmem:[%s809] sm:$0x2]
            %v811 = vlaneseq
            %v812 = vshrl.u32 %v811, 7
            %vm813 = vcmp.eq.s32.totalorder %v812, 0
            %v814 = vsel %vm813, %v807, %v810
            %s815 = scalar_lea.vmem %s805, 1
            %v816 = vld [vmem:[%s815] ss:$0 sm:$0xff]
            %817 = vst [vmem:[%s805] sm:$0x3] %v814
            %v818 = vld [vmem:[%s806] ss:$0 sm:$0xff]
            %s819 = scalar_lea.vmem %s805, 1
            %820 = vst [vmem:[%s819] sm:$0x1] %v818
            %s821 = scalar_lea.vmem %s806, 1
            %v822 = vld [vmem:[%s821] sm:$0x1]
            %v823 = vlaneseq
            %v824 = vshrl.u32 %v823, 7
            %vm825 = vcmp.eq.s32.totalorder %v824, 1
            %v826 = vsel %vm825, %v816, %v822
            %v827 = vld [vmem:[%s806] ss:$0 sm:$0xff]
            %828 = vst [vmem:[%s806] sm:$0x3] %v826
            %s829 = smov [#allocation31]
            %v830 = vld [vmem:[%s829] sm:$0xff]
            %s831 = smov [#allocation32]
            %v832 = vld [vmem:[%s831] sm:$0xff]
            %s833 = smov [#allocation12]
            %s834 = smov [#allocation14]
            %s835 = smov [#allocation16]
            %s836 = smov [#allocation18]
            %v837 = vld [vmem:[%s833] sm:$0x3]
            %v838 = vld [vmem:[%s834] sm:$0x3]
            %v839 = vld [vmem:[%s835] sm:$0x3]
            %v840 = vld [vmem:[%s836] sm:$0x3]
            %v841 = vmul.f32 %v830, %v837
            %v842 = vmul.f32 %v832, %v839
            %v843 = vsub.f32 %v841, %v842
            %v844 = vmul.f32 %v830, %v838
            %v845 = vmul.f32 %v832, %v840
            %v846 = vsub.f32 %v844, %v845
            %v847 = vmul.f32 %v832, %v837
            %v848 = vmul.f32 %v830, %v839
            %v849 = vadd.f32 %v847, %v848
            %v850 = vmul.f32 %v832, %v838
            %v851 = vmul.f32 %v830, %v840
            %v852 = vadd.f32 %v850, %v851
            %853 = vst [vmem:[%s833] sm:$0x3] %v843
            %854 = vst [vmem:[%s834] sm:$0x3] %v846
            %855 = vst [vmem:[%s835] sm:$0x3] %v849
            %856 = vst [vmem:[%s836] sm:$0x3] %v852
            %s857 = smov [#allocation12]
            %s858 = smov [#allocation16]
            %v859 = vld [vmem:[%s857] ss:$0 sm:$0xff]
            %s861 = scalar_lea.vmem %s857, 4294967295
            %v862 = vld [vmem:[%s861] sm:$0x2]
            %v863 = vlaneseq
            %v864 = vshrl.u32 %v863, 7
            %vm865 = vcmp.eq.s32.totalorder %v864, 0
            %v866 = vsel %vm865, %v859, %v862
            %s867 = scalar_lea.vmem %s857, 1
            %v868 = vld [vmem:[%s867] ss:$0 sm:$0xff]
            %869 = vst [vmem:[%s857] sm:$0x3] %v866
            %v870 = vld [vmem:[%s858] ss:$0 sm:$0xff]
            %s871 = scalar_lea.vmem %s857, 1
            %872 = vst [vmem:[%s871] sm:$0x1] %v870
            %s873 = scalar_lea.vmem %s858, 1
            %v874 = vld [vmem:[%s873] sm:$0x1]
            %v875 = vlaneseq
            %v876 = vshrl.u32 %v875, 7
            %vm877 = vcmp.eq.s32.totalorder %v876, 1
            %v878 = vsel %vm877, %v868, %v874
            %v879 = vld [vmem:[%s858] ss:$0 sm:$0xff]
            %880 = vst [vmem:[%s858] sm:$0x3] %v878
            %s881 = smov [#allocation14]
            %s882 = smov [#allocation18]
            %v883 = vld [vmem:[%s881] ss:$0 sm:$0xff]
            %s885 = scalar_lea.vmem %s881, 4294967295
            %v886 = vld [vmem:[%s885] sm:$0x2]
            %v887 = vlaneseq
            %v888 = vshrl.u32 %v887, 7
            %vm889 = vcmp.eq.s32.totalorder %v888, 0
            %v890 = vsel %vm889, %v883, %v886
            %s891 = scalar_lea.vmem %s881, 1
            %v892 = vld [vmem:[%s891] ss:$0 sm:$0xff]
            %893 = vst [vmem:[%s881] sm:$0x3] %v890
            %v894 = vld [vmem:[%s882] ss:$0 sm:$0xff]
            %s895 = scalar_lea.vmem %s881, 1
            %896 = vst [vmem:[%s895] sm:$0x1] %v894
            %s897 = scalar_lea.vmem %s882, 1
            %v898 = vld [vmem:[%s897] sm:$0x1]
            %v899 = vlaneseq
            %v900 = vshrl.u32 %v899, 7
            %vm901 = vcmp.eq.s32.totalorder %v900, 1
            %v902 = vsel %vm901, %v892, %v898
            %v903 = vld [vmem:[%s882] ss:$0 sm:$0xff]
            %904 = vst [vmem:[%s882] sm:$0x3] %v902
          $region152: #{custom-call.2} parent=144 // loop_footer
            %s465 = sadd.s32 1, %s461
          $region153: #{custom-call.2} parent=144 // loop_footer_branch
            %460 = sbr.rel target = $region149
          $region154: #{custom-call.2} parent=144 // loop_exit
            _
          %s905 = sadd.s32 %s363, 1
        $region145: #{custom-call.2} parent=139 // loop_footer
          _
        $region146: #{custom-call.2} parent=139 // loop_footer_branch
          %362 = sbr.rel target = $region142
        $region147: #{custom-call.2} parent=139 // loop_exit
          _
        %s908 = sand.u32 %s17, 7
        %s909 = scalar_lea.vmem [#allocation8], %s908
        %s910 = sand.u32 %s17, 7
        %s911 = scalar_lea.vmem [#allocation10], %s910
        %s912 = smov [#allocation20]
        %s913 = smov %s909
        %v914 = vlaneseq
        %v915 = vand.u32 %v914, 127
        %v916 = vmov %v915
        %v917 = vlaneseq
        %v918 = vshrl.u32 %v917, 7
        %v919 = vmov %v918
        %v920 = vld [vmem:[%s912] sm:$0x3]
        %vm923 = vcmp.eq.s32.totalorder %v919, %v916
        %v924 = vsel %vm923, %v920, 0.0
        %v925 = vrot.slane %v924, 4
        %v926 = vadd.f32 %v924, %v925
        %v927 = vrot.slane %v926, 2
        %v928 = vadd.f32 %v926, %v927
        %v929 = vrot.slane %v928, 1
        %v930 = vadd.f32 %v928, %v929
        %931 = vst [vmem:[%s913] sm:$0x1] %v930
        %s932 = smov [#allocation23]
        %s933 = smov %s911
        %v934 = vlaneseq
        %v935 = vand.u32 %v934, 127
        %v936 = vmov %v935
        %v937 = vlaneseq
        %v938 = vshrl.u32 %v937, 7
        %v939 = vmov %v938
        %v940 = vld [vmem:[%s932] sm:$0x3]
        %vm943 = vcmp.eq.s32.totalorder %v939, %v936
        %v944 = vsel %vm943, %v940, 0.0
        %v945 = vrot.slane %v944, 4
        %v946 = vadd.f32 %v944, %v945
        %v947 = vrot.slane %v946, 2
        %v948 = vadd.f32 %v946, %v947
        %v949 = vrot.slane %v948, 1
        %v950 = vadd.f32 %v948, %v949
        %951 = vst [vmem:[%s933] sm:$0x1] %v950
        %s953 = sshllo.u32 0, 4
        %v955 = vld [vmem:[#allocation8] sm:%s953]
        %s956 = sshllo.u32 0, 4
        %957 = vst [vmem:[%s279] sm:%s956] %v955
        %s959 = sshllo.u32 0, 4
        %v961 = vld [vmem:[#allocation10] sm:%s959]
        %s962 = sshllo.u32 0, 4
        %963 = vst [vmem:[%s285] sm:%s962] %v961
        %s965 = sshllo.u32 0, 2
        %v967 = vld [vmem:[#allocation12] sm:%s965]
        %s968 = sshllo.u32 0, 2
        %969 = vst [vmem:[%s289] sm:%s968] %v967
        %s971 = sshllo.u32 0, 2
        %v973 = vld [vmem:[#allocation14] sm:%s971]
        %s974 = sshllo.u32 0, 2
        %975 = vst [vmem:[%s293] sm:%s974] %v973
        %s977 = sshllo.u32 0, 2
        %v979 = vld [vmem:[#allocation16] sm:%s977]
        %s980 = sshllo.u32 0, 2
        %981 = vst [vmem:[%s297] sm:%s980] %v979
        %s983 = sshllo.u32 0, 2
        %v985 = vld [vmem:[#allocation18] sm:%s983]
        %s986 = sshllo.u32 0, 2
        %987 = vst [vmem:[%s301] sm:%s986] %v985
        %s988 = sand.u32 %s27, 1
        %s989 = sand.u32 %s27, 1
        %s990 = smul.addr %s989, 4
        %s991 = scalar_lea.vmem [#allocation9], %s990
        %s992 = sand.u32 %s55, 1
        %s993 = sand.u32 %s55, 1
        %s994 = smul.addr %s993, 4
        %s995 = scalar_lea.vmem [#allocation11], %s994
        %s996 = sand.u32 %s17, 1
        %s997 = sand.u32 %s17, 1
        %s998 = smul.addr %s997, 2
        %s999 = scalar_lea.vmem [#allocation13], %s998
        %s1000 = sand.u32 %s17, 1
        %s1001 = sand.u32 %s17, 1
        %s1002 = smul.addr %s1001, 2
        %s1003 = scalar_lea.vmem [#allocation15], %s1002
        %s1004 = sand.u32 %s17, 1
        %s1005 = sand.u32 %s17, 1
        %s1006 = smul.addr %s1005, 2
        %s1007 = scalar_lea.vmem [#allocation17], %s1006
        %s1008 = sand.u32 %s17, 1
        %s1009 = sand.u32 %s17, 1
        %s1010 = smul.addr %s1009, 2
        %s1011 = scalar_lea.vmem [#allocation19], %s1010
        // Predicated region
        $region155: #{custom-call.2} parent=139 // pred_check
          %p1012 = pneg %p37
        $region156: #{custom-call.2} parent=139 // pred_check_branch
          %1014 = sbr.rel (%p1012) target = $region158
        $region157: #{custom-call.2} parent=139 // pred_region
          %s1015 = sshrl.u32 %s17, 3
          %s1016 = smul.addr %s1015, 4
          %s1017 = scalar_lea.vmem %s4, %s1016
          // Predicated region
          $region159: #{custom-call.2} parent=157 // pred_check
            _
          $region160: #{custom-call.2} parent=157 // pred_check_branch
            %1019 = sbr.rel (0) target = $region162
          $region161: #{custom-call.2} parent=157 // pred_region
            // Predicated region
            $region163: #{custom-call.2} parent=161 // pred_check
              _
            $region164: #{custom-call.2} parent=161 // pred_check_branch
              %1021 = sbr.rel target = $region166
            $region165: #{custom-call.2} parent=161 // pred_region
              // Predicated region
              $region178: #{custom-call.2} parent=165 // pred_check
                _
              $region179: #{custom-call.2} parent=165 // pred_check_branch
                %1036 = sbr.rel (0) target = $region181
              $region180: #{custom-call.2} parent=165 // pred_region
                loop: start=0, step=1, limit=1
                $region182: #{custom-call.2} parent=180 // loop_pre_header
                  _
                $region183: #{custom-call.2} parent=180 // loop_header
                  %s1039 = sphi 0, %s1043
                  %p1040 = scmp.ge.s32.totalorder %s1039, 1
                  %s1044 = sphi %s991, %s991
                  %s1045 = sphi %s1017, %s1017
                $region184: #{custom-call.2} parent=180 // loop_header_branch
                  %1042 = sbr.rel (%p1040) target = $region188
                $region185: #{custom-call.2} parent=180 // loop_body
                  %v1046 = vld [vmem:[%s1044] sm:$0xf]
                  %1047 = vst [vmem:[%s1045] sm:$0xf] %v1046
                $region186: #{custom-call.2} parent=180 // loop_footer
                  %s1043 = sadd.s32 1, %s1039
                $region187: #{custom-call.2} parent=180 // loop_footer_branch
                  %1038 = sbr.rel target = $region183
                $region188: #{custom-call.2} parent=180 // loop_exit
                  _
              $region181: #{custom-call.2} parent=165 // pred_fallthru
                _
            $region166: #{custom-call.2} parent=161 // pred_fallthru
              _
            // Predicated region
            $region167: #{custom-call.2} parent=161 // pred_check
              _
            $region168: #{custom-call.2} parent=161 // pred_check_branch
              %1023 = sbr.rel (0) target = $region170
            $region169: #{custom-call.2} parent=161 // pred_region
              loop: start=0, step=1, limit=1
              $region171: #{custom-call.2} parent=169 // loop_pre_header
                _
              $region172: #{custom-call.2} parent=169 // loop_header
                %s1026 = sphi 0, %s1030
                %p1027 = scmp.ge.s32.totalorder %s1026, 1
                %s1031 = sphi %s991, %s991
                %s1032 = sphi %s1017, %s1017
              $region173: #{custom-call.2} parent=169 // loop_header_branch
                %1029 = sbr.rel (%p1027) target = $region177
              $region174: #{custom-call.2} parent=169 // loop_body
                %v1033 = vld [vmem:[%s1031] sm:$0xf]
                %1034 = vst [vmem:[%s1032] sm:$0xf] %v1033
              $region175: #{custom-call.2} parent=169 // loop_footer
                %s1030 = sadd.s32 1, %s1026
              $region176: #{custom-call.2} parent=169 // loop_footer_branch
                %1025 = sbr.rel target = $region172
              $region177: #{custom-call.2} parent=169 // loop_exit
                _
            $region170: #{custom-call.2} parent=161 // pred_fallthru
              _
          $region162: #{custom-call.2} parent=157 // pred_fallthru
            _
          %1048 = vnop
        $region158: #{custom-call.2} parent=139 // pred_fallthru
          _
        // Predicated region
        $region189: #{custom-call.2} parent=139 // pred_check
          %p1049 = pneg %p65
        $region190: #{custom-call.2} parent=139 // pred_check_branch
          %1051 = sbr.rel (%p1049) target = $region192
        $region191: #{custom-call.2} parent=139 // pred_region
          %s1052 = sshrl.u32 %s17, 3
          %s1053 = smul.addr %s1052, 4
          %s1054 = scalar_lea.vmem %s5, %s1053
          // Predicated region
          $region193: #{custom-call.2} parent=191 // pred_check
            _
          $region194: #{custom-call.2} parent=191 // pred_check_branch
            %1056 = sbr.rel (0) target = $region196
          $region195: #{custom-call.2} parent=191 // pred_region
            // Predicated region
            $region197: #{custom-call.2} parent=195 // pred_check
              _
            $region198: #{custom-call.2} parent=195 // pred_check_branch
              %1058 = sbr.rel target = $region200
            $region199: #{custom-call.2} parent=195 // pred_region
              // Predicated region
              $region212: #{custom-call.2} parent=199 // pred_check
                _
              $region213: #{custom-call.2} parent=199 // pred_check_branch
                %1073 = sbr.rel (0) target = $region215
              $region214: #{custom-call.2} parent=199 // pred_region
                loop: start=0, step=1, limit=1
                $region216: #{custom-call.2} parent=214 // loop_pre_header
                  _
                $region217: #{custom-call.2} parent=214 // loop_header
                  %s1076 = sphi 0, %s1080
                  %p1077 = scmp.ge.s32.totalorder %s1076, 1
                  %s1081 = sphi %s995, %s995
                  %s1082 = sphi %s1054, %s1054
                $region218: #{custom-call.2} parent=214 // loop_header_branch
                  %1079 = sbr.rel (%p1077) target = $region222
                $region219: #{custom-call.2} parent=214 // loop_body
                  %v1083 = vld [vmem:[%s1081] sm:$0xf]
                  %1084 = vst [vmem:[%s1082] sm:$0xf] %v1083
                $region220: #{custom-call.2} parent=214 // loop_footer
                  %s1080 = sadd.s32 1, %s1076
                $region221: #{custom-call.2} parent=214 // loop_footer_branch
                  %1075 = sbr.rel target = $region217
                $region222: #{custom-call.2} parent=214 // loop_exit
                  _
              $region215: #{custom-call.2} parent=199 // pred_fallthru
                _
            $region200: #{custom-call.2} parent=195 // pred_fallthru
              _
            // Predicated region
            $region201: #{custom-call.2} parent=195 // pred_check
              _
            $region202: #{custom-call.2} parent=195 // pred_check_branch
              %1060 = sbr.rel (0) target = $region204
            $region203: #{custom-call.2} parent=195 // pred_region
              loop: start=0, step=1, limit=1
              $region205: #{custom-call.2} parent=203 // loop_pre_header
                _
              $region206: #{custom-call.2} parent=203 // loop_header
                %s1063 = sphi 0, %s1067
                %p1064 = scmp.ge.s32.totalorder %s1063, 1
                %s1068 = sphi %s995, %s995
                %s1069 = sphi %s1054, %s1054
              $region207: #{custom-call.2} parent=203 // loop_header_branch
                %1066 = sbr.rel (%p1064) target = $region211
              $region208: #{custom-call.2} parent=203 // loop_body
                %v1070 = vld [vmem:[%s1068] sm:$0xf]
                %1071 = vst [vmem:[%s1069] sm:$0xf] %v1070
              $region209: #{custom-call.2} parent=203 // loop_footer
                %s1067 = sadd.s32 1, %s1063
              $region210: #{custom-call.2} parent=203 // loop_footer_branch
                %1062 = sbr.rel target = $region206
              $region211: #{custom-call.2} parent=203 // loop_exit
                _
            $region204: #{custom-call.2} parent=195 // pred_fallthru
              _
          $region196: #{custom-call.2} parent=191 // pred_fallthru
            _
          %1085 = vnop
        $region192: #{custom-call.2} parent=139 // pred_fallthru
          _
        %s1086 = smul.addr %s17, 2
        %s1087 = scalar_lea.vmem %s6, %s1086
        // Predicated region
        $region223: #{custom-call.2} parent=139 // pred_check
          _
        $region224: #{custom-call.2} parent=139 // pred_check_branch
          %1089 = sbr.rel (0) target = $region226
        $region225: #{custom-call.2} parent=139 // pred_region
          // Predicated region
          $region227: #{custom-call.2} parent=225 // pred_check
            _
          $region228: #{custom-call.2} parent=225 // pred_check_branch
            %1091 = sbr.rel target = $region230
          $region229: #{custom-call.2} parent=225 // pred_region
            // Predicated region
            $region242: #{custom-call.2} parent=229 // pred_check
              _
            $region243: #{custom-call.2} parent=229 // pred_check_branch
              %1106 = sbr.rel (0) target = $region245
            $region244: #{custom-call.2} parent=229 // pred_region
              loop: start=0, step=1, limit=1
              $region246: #{custom-call.2} parent=244 // loop_pre_header
                _
              $region247: #{custom-call.2} parent=244 // loop_header
                %s1109 = sphi 0, %s1113
                %p1110 = scmp.ge.s32.totalorder %s1109, 1
                %s1114 = sphi %s999, %s999
                %s1115 = sphi %s1087, %s1087
              $region248: #{custom-call.2} parent=244 // loop_header_branch
                %1112 = sbr.rel (%p1110) target = $region252
              $region249: #{custom-call.2} parent=244 // loop_body
                %v1116 = vld [vmem:[%s1114] sm:$0x3]
                %1117 = vst [vmem:[%s1115] sm:$0x3] %v1116
              $region250: #{custom-call.2} parent=244 // loop_footer
                %s1113 = sadd.s32 1, %s1109
              $region251: #{custom-call.2} parent=244 // loop_footer_branch
                %1108 = sbr.rel target = $region247
              $region252: #{custom-call.2} parent=244 // loop_exit
                _
            $region245: #{custom-call.2} parent=229 // pred_fallthru
              _
          $region230: #{custom-call.2} parent=225 // pred_fallthru
            _
          // Predicated region
          $region231: #{custom-call.2} parent=225 // pred_check
            _
          $region232: #{custom-call.2} parent=225 // pred_check_branch
            %1093 = sbr.rel (0) target = $region234
          $region233: #{custom-call.2} parent=225 // pred_region
            loop: start=0, step=1, limit=1
            $region235: #{custom-call.2} parent=233 // loop_pre_header
              _
            $region236: #{custom-call.2} parent=233 // loop_header
              %s1096 = sphi 0, %s1100
              %p1097 = scmp.ge.s32.totalorder %s1096, 1
              %s1101 = sphi %s999, %s999
              %s1102 = sphi %s1087, %s1087
            $region237: #{custom-call.2} parent=233 // loop_header_branch
              %1099 = sbr.rel (%p1097) target = $region241
            $region238: #{custom-call.2} parent=233 // loop_body
              %v1103 = vld [vmem:[%s1101] sm:$0x3]
              %1104 = vst [vmem:[%s1102] sm:$0x3] %v1103
            $region239: #{custom-call.2} parent=233 // loop_footer
              %s1100 = sadd.s32 1, %s1096
            $region240: #{custom-call.2} parent=233 // loop_footer_branch
              %1095 = sbr.rel target = $region236
            $region241: #{custom-call.2} parent=233 // loop_exit
              _
          $region234: #{custom-call.2} parent=225 // pred_fallthru
            _
        $region226: #{custom-call.2} parent=139 // pred_fallthru
          _
        %1118 = vnop
        %s1119 = smul.addr %s17, 2
        %s1120 = scalar_lea.vmem %s7, %s1119
        // Predicated region
        $region253: #{custom-call.2} parent=139 // pred_check
          _
        $region254: #{custom-call.2} parent=139 // pred_check_branch
          %1122 = sbr.rel (0) target = $region256
        $region255: #{custom-call.2} parent=139 // pred_region
          // Predicated region
          $region257: #{custom-call.2} parent=255 // pred_check
            _
          $region258: #{custom-call.2} parent=255 // pred_check_branch
            %1124 = sbr.rel target = $region260
          $region259: #{custom-call.2} parent=255 // pred_region
            // Predicated region
            $region272: #{custom-call.2} parent=259 // pred_check
              _
            $region273: #{custom-call.2} parent=259 // pred_check_branch
              %1139 = sbr.rel (0) target = $region275
            $region274: #{custom-call.2} parent=259 // pred_region
              loop: start=0, step=1, limit=1
              $region276: #{custom-call.2} parent=274 // loop_pre_header
                _
              $region277: #{custom-call.2} parent=274 // loop_header
                %s1142 = sphi 0, %s1146
                %p1143 = scmp.ge.s32.totalorder %s1142, 1
                %s1147 = sphi %s1003, %s1003
                %s1148 = sphi %s1120, %s1120
              $region278: #{custom-call.2} parent=274 // loop_header_branch
                %1145 = sbr.rel (%p1143) target = $region282
              $region279: #{custom-call.2} parent=274 // loop_body
                %v1149 = vld [vmem:[%s1147] sm:$0x3]
                %1150 = vst [vmem:[%s1148] sm:$0x3] %v1149
              $region280: #{custom-call.2} parent=274 // loop_footer
                %s1146 = sadd.s32 1, %s1142
              $region281: #{custom-call.2} parent=274 // loop_footer_branch
                %1141 = sbr.rel target = $region277
              $region282: #{custom-call.2} parent=274 // loop_exit
                _
            $region275: #{custom-call.2} parent=259 // pred_fallthru
              _
          $region260: #{custom-call.2} parent=255 // pred_fallthru
            _
          // Predicated region
          $region261: #{custom-call.2} parent=255 // pred_check
            _
          $region262: #{custom-call.2} parent=255 // pred_check_branch
            %1126 = sbr.rel (0) target = $region264
          $region263: #{custom-call.2} parent=255 // pred_region
            loop: start=0, step=1, limit=1
            $region265: #{custom-call.2} parent=263 // loop_pre_header
              _
            $region266: #{custom-call.2} parent=263 // loop_header
              %s1129 = sphi 0, %s1133
              %p1130 = scmp.ge.s32.totalorder %s1129, 1
              %s1134 = sphi %s1003, %s1003
              %s1135 = sphi %s1120, %s1120
            $region267: #{custom-call.2} parent=263 // loop_header_branch
              %1132 = sbr.rel (%p1130) target = $region271
            $region268: #{custom-call.2} parent=263 // loop_body
              %v1136 = vld [vmem:[%s1134] sm:$0x3]
              %1137 = vst [vmem:[%s1135] sm:$0x3] %v1136
            $region269: #{custom-call.2} parent=263 // loop_footer
              %s1133 = sadd.s32 1, %s1129
            $region270: #{custom-call.2} parent=263 // loop_footer_branch
              %1128 = sbr.rel target = $region266
            $region271: #{custom-call.2} parent=263 // loop_exit
              _
          $region264: #{custom-call.2} parent=255 // pred_fallthru
            _
        $region256: #{custom-call.2} parent=139 // pred_fallthru
          _
        %1151 = vnop
        %s1152 = smul.addr %s17, 2
        %s1153 = scalar_lea.vmem %s8, %s1152
        // Predicated region
        $region283: #{custom-call.2} parent=139 // pred_check
          _
        $region284: #{custom-call.2} parent=139 // pred_check_branch
          %1155 = sbr.rel (0) target = $region286
        $region285: #{custom-call.2} parent=139 // pred_region
          // Predicated region
          $region287: #{custom-call.2} parent=285 // pred_check
            _
          $region288: #{custom-call.2} parent=285 // pred_check_branch
            %1157 = sbr.rel target = $region290
          $region289: #{custom-call.2} parent=285 // pred_region
            // Predicated region
            $region302: #{custom-call.2} parent=289 // pred_check
              _
            $region303: #{custom-call.2} parent=289 // pred_check_branch
              %1172 = sbr.rel (0) target = $region305
            $region304: #{custom-call.2} parent=289 // pred_region
              loop: start=0, step=1, limit=1
              $region306: #{custom-call.2} parent=304 // loop_pre_header
                _
              $region307: #{custom-call.2} parent=304 // loop_header
                %s1175 = sphi 0, %s1179
                %p1176 = scmp.ge.s32.totalorder %s1175, 1
                %s1180 = sphi %s1007, %s1007
                %s1181 = sphi %s1153, %s1153
              $region308: #{custom-call.2} parent=304 // loop_header_branch
                %1178 = sbr.rel (%p1176) target = $region312
              $region309: #{custom-call.2} parent=304 // loop_body
                %v1182 = vld [vmem:[%s1180] sm:$0x3]
                %1183 = vst [vmem:[%s1181] sm:$0x3] %v1182
              $region310: #{custom-call.2} parent=304 // loop_footer
                %s1179 = sadd.s32 1, %s1175
              $region311: #{custom-call.2} parent=304 // loop_footer_branch
                %1174 = sbr.rel target = $region307
              $region312: #{custom-call.2} parent=304 // loop_exit
                _
            $region305: #{custom-call.2} parent=289 // pred_fallthru
              _
          $region290: #{custom-call.2} parent=285 // pred_fallthru
            _
          // Predicated region
          $region291: #{custom-call.2} parent=285 // pred_check
            _
          $region292: #{custom-call.2} parent=285 // pred_check_branch
            %1159 = sbr.rel (0) target = $region294
          $region293: #{custom-call.2} parent=285 // pred_region
            loop: start=0, step=1, limit=1
            $region295: #{custom-call.2} parent=293 // loop_pre_header
              _
            $region296: #{custom-call.2} parent=293 // loop_header
              %s1162 = sphi 0, %s1166
              %p1163 = scmp.ge.s32.totalorder %s1162, 1
              %s1167 = sphi %s1007, %s1007
              %s1168 = sphi %s1153, %s1153
            $region297: #{custom-call.2} parent=293 // loop_header_branch
              %1165 = sbr.rel (%p1163) target = $region301
            $region298: #{custom-call.2} parent=293 // loop_body
              %v1169 = vld [vmem:[%s1167] sm:$0x3]
              %1170 = vst [vmem:[%s1168] sm:$0x3] %v1169
            $region299: #{custom-call.2} parent=293 // loop_footer
              %s1166 = sadd.s32 1, %s1162
            $region300: #{custom-call.2} parent=293 // loop_footer_branch
              %1161 = sbr.rel target = $region296
            $region301: #{custom-call.2} parent=293 // loop_exit
              _
          $region294: #{custom-call.2} parent=285 // pred_fallthru
            _
        $region286: #{custom-call.2} parent=139 // pred_fallthru
          _
        %1184 = vnop
        %s1185 = smul.addr %s17, 2
        %s1186 = scalar_lea.vmem %s9, %s1185
        // Predicated region
        $region313: #{custom-call.2} parent=139 // pred_check
          _
        $region314: #{custom-call.2} parent=139 // pred_check_branch
          %1188 = sbr.rel (0) target = $region316
        $region315: #{custom-call.2} parent=139 // pred_region
          // Predicated region
          $region317: #{custom-call.2} parent=315 // pred_check
            _
          $region318: #{custom-call.2} parent=315 // pred_check_branch
            %1190 = sbr.rel target = $region320
          $region319: #{custom-call.2} parent=315 // pred_region
            // Predicated region
            $region332: #{custom-call.2} parent=319 // pred_check
              _
            $region333: #{custom-call.2} parent=319 // pred_check_branch
              %1205 = sbr.rel (0) target = $region335
            $region334: #{custom-call.2} parent=319 // pred_region
              loop: start=0, step=1, limit=1
              $region336: #{custom-call.2} parent=334 // loop_pre_header
                _
              $region337: #{custom-call.2} parent=334 // loop_header
                %s1208 = sphi 0, %s1212
                %p1209 = scmp.ge.s32.totalorder %s1208, 1
                %s1213 = sphi %s1011, %s1011
                %s1214 = sphi %s1186, %s1186
              $region338: #{custom-call.2} parent=334 // loop_header_branch
                %1211 = sbr.rel (%p1209) target = $region342
              $region339: #{custom-call.2} parent=334 // loop_body
                %v1215 = vld [vmem:[%s1213] sm:$0x3]
                %1216 = vst [vmem:[%s1214] sm:$0x3] %v1215
              $region340: #{custom-call.2} parent=334 // loop_footer
                %s1212 = sadd.s32 1, %s1208
              $region341: #{custom-call.2} parent=334 // loop_footer_branch
                %1207 = sbr.rel target = $region337
              $region342: #{custom-call.2} parent=334 // loop_exit
                _
            $region335: #{custom-call.2} parent=319 // pred_fallthru
              _
          $region320: #{custom-call.2} parent=315 // pred_fallthru
            _
          // Predicated region
          $region321: #{custom-call.2} parent=315 // pred_check
            _
          $region322: #{custom-call.2} parent=315 // pred_check_branch
            %1192 = sbr.rel (0) target = $region324
          $region323: #{custom-call.2} parent=315 // pred_region
            loop: start=0, step=1, limit=1
            $region325: #{custom-call.2} parent=323 // loop_pre_header
              _
            $region326: #{custom-call.2} parent=323 // loop_header
              %s1195 = sphi 0, %s1199
              %p1196 = scmp.ge.s32.totalorder %s1195, 1
              %s1200 = sphi %s1011, %s1011
              %s1201 = sphi %s1186, %s1186
            $region327: #{custom-call.2} parent=323 // loop_header_branch
              %1198 = sbr.rel (%p1196) target = $region331
            $region328: #{custom-call.2} parent=323 // loop_body
              %v1202 = vld [vmem:[%s1200] sm:$0x3]
              %1203 = vst [vmem:[%s1201] sm:$0x3] %v1202
            $region329: #{custom-call.2} parent=323 // loop_footer
              %s1199 = sadd.s32 1, %s1195
            $region330: #{custom-call.2} parent=323 // loop_footer_branch
              %1194 = sbr.rel target = $region326
            $region331: #{custom-call.2} parent=323 // loop_exit
              _
          $region324: #{custom-call.2} parent=315 // pred_fallthru
            _
        $region316: #{custom-call.2} parent=139 // pred_fallthru
          _
        %1217 = vnop
      $region140: #{custom-call.2} parent=5 // pred_fallthru
        _
      %p1218 = scmp.le.s32.totalorder 2, %s12
      // Predicated region
      $region343: #{custom-call.2} parent=5 // pred_check
        %p1219 = pneg %p1218
      $region344: #{custom-call.2} parent=5 // pred_check_branch
        %1221 = sbr.rel (%p1219) target = $region346
      $region345: #{custom-call.2} parent=5 // pred_region
        %s1222 = ssub.s32 %s12, 2
        // Predicated region
        $region347: #{custom-call.2} parent=345 // pred_check
          %p1223 = pneg %p43
        $region348: #{custom-call.2} parent=345 // pred_check_branch
          %1225 = sbr.rel (%p1223) target = $region350
        $region349: #{custom-call.2} parent=345 // pred_region
          %s1226 = sand.u32 %s28, 1
          %s1227 = sand.u32 %s28, 1
          %s1228 = smul.addr %s1227, 4
          %s1229 = scalar_lea.vmem [#allocation9], %s1228
        $region350: #{custom-call.2} parent=345 // pred_fallthru
          _
        // Predicated region
        $region351: #{custom-call.2} parent=345 // pred_check
          %p1230 = pneg %p71
        $region352: #{custom-call.2} parent=345 // pred_check_branch
          %1232 = sbr.rel (%p1230) target = $region354
        $region353: #{custom-call.2} parent=345 // pred_region
          %s1233 = sand.u32 %s56, 1
          %s1234 = sand.u32 %s56, 1
          %s1235 = smul.addr %s1234, 4
          %s1236 = scalar_lea.vmem [#allocation11], %s1235
        $region354: #{custom-call.2} parent=345 // pred_fallthru
          _
        %s1237 = sand.u32 %s18, 1
        %s1238 = sand.u32 %s18, 1
        %s1239 = smul.addr %s1238, 2
        %s1240 = scalar_lea.vmem [#allocation13], %s1239
        %s1241 = sand.u32 %s18, 1
        %s1242 = sand.u32 %s18, 1
        %s1243 = smul.addr %s1242, 2
        %s1244 = scalar_lea.vmem [#allocation15], %s1243
        %s1245 = sand.u32 %s18, 1
        %s1246 = sand.u32 %s18, 1
        %s1247 = smul.addr %s1246, 2
        %s1248 = scalar_lea.vmem [#allocation17], %s1247
        %s1249 = sand.u32 %s18, 1
        %s1250 = sand.u32 %s18, 1
        %s1251 = smul.addr %s1250, 2
        %s1252 = scalar_lea.vmem [#allocation19], %s1251
      $region346: #{custom-call.2} parent=5 // pred_fallthru
        _
    $region6: #{custom-call.2} parent=1 // loop_footer
      %s16 = sadd.s32 1, %s12
    $region7: #{custom-call.2} parent=1 // loop_footer_branch
      %11 = sbr.rel target = $region3
    $region8: #{custom-call.2} parent=1 // loop_exit
      _

// kernel: _forward_impl.2
$region0: #{_forward_impl.2}
  #allocation0 [shape = 'u32[]', space=smem, size = 0x4, offset = 0x4, fixed_abs, tag = 'smem constant byte address 0x4 - core index']
  #allocation1 [shape = 'u32[144,128]{1,0:T(1,128)}', space=vmem, size = 0x12000, scoped, tag = 'internal scratch']
  %s0 = inlined_call_operand.vmem [shape: f32[2,16,256], index: 0, kind: input, shape index: {}]
  %s1 = inlined_call_operand.vmem [shape: f32[2,16,1], index: 1, kind: output, shape index: {0}]
  %s2 = inlined_call_operand.vmem [shape: f32[2,16,16], index: 2, kind: output, shape index: {1}]
  %3 = xla_tuple %s1, %s2
  %s4 = sld [smem:[#allocation0]]
  $region49: #{_forward_impl.2} parent=0
    _
  %s6 = ssub.s32 1, %s4
  %s7 = scalar_select 0, %s6, %s4
  loop: start=0, step=1, limit=4
  $region2: #{_forward_impl.2} parent=0 // loop_pre_header
    _
  $region3: #{_forward_impl.2} parent=0 // loop_header
    %s9 = sphi 0, %s13
    %p10 = scmp.ge.s32.totalorder %s9, 4
    %s16 = sphi 0, %s28
    %s17 = sphi 0, %s24
    %s18 = sphi 0, %s16
    %s19 = sphi 0, %s17
    %s20 = sphi 0, %s18
    %s21 = sphi 0, %s19
    %s33 = sphi 0, %s35
    %s36 = sphi 0, %s33
    %s37 = sphi 0, %s36
    %s53 = sphi 0, %s37
    %s59 = sphi 0, %s61
    %s62 = sphi 0, %s59
    %s63 = sphi 0, %s62
    %s79 = sphi 0, %s63
    %s85 = sphi 0, %s87
    %s88 = sphi 0, %s85
    %s89 = sphi 0, %s88
    %s105 = sphi 0, %s89
  $region4: #{_forward_impl.2} parent=0 // loop_header_branch
    %12 = sbr.rel (%p10) target = $region8
  $region5: #{_forward_impl.2} parent=0 // loop_body
    %s14 = ssub.s32 %s9, 1
    %s15 = ssub.s32 %s9, 2
    %s22 = sadd.s32 1, %s17
    %p23 = scmp.ge.s32.totalorder %s22, 1
    %s24 = scalar_select %p23, 0, %s22
    %s25 = sadd.s32 1, %s16
    %s26 = scalar_select %p23, %s25, %s16
    %p27 = scmp.ge.s32.totalorder %s26, 2
    %s28 = scalar_select %p27, 0, %s26
    %s29 = ssub.s32 %s16, %s28
    %s30 = ssub.s32 %s17, %s24
    %s31 = sor.u32 %s29, %s30
    %p32 = scmp.eq.s32.totalorder %s31, 0
    %s34 = sadd.s32 %s33, 1
    %s35 = scalar_select %p32, %s33, %s34
    %p38 = pneg %p32
    %p39 = scmp.eq.s32.totalorder %s9, 1
    %p40 = por %p38, %p39
    %p41 = scmp.ne.s32.totalorder %s33, %s36
    %p42 = scmp.eq.s32.totalorder %s9, 0
    %p43 = por %p41, %p42
    %p44 = scmp.ne.s32.totalorder %s33, %s36
    %p45 = scmp.eq.s32.totalorder %s14, 1
    %p46 = por %p44, %p45
    %p47 = scmp.ne.s32.totalorder %s36, %s37
    %p48 = scmp.eq.s32.totalorder %s14, 0
    %p49 = por %p47, %p48
    %p50 = scmp.ne.s32.totalorder %s36, %s37
    %p51 = scmp.eq.s32.totalorder %s15, 1
    %p52 = por %p50, %p51
    %p54 = scmp.ne.s32.totalorder %s37, %s53
    %p55 = scmp.eq.s32.totalorder %s15, 0
    %p56 = por %p54, %p55
    %s57 = ssub.s32 %s16, %s28
    %p58 = scmp.eq.s32.totalorder %s57, 0
    %s60 = sadd.s32 %s59, 1
    %s61 = scalar_select %p58, %s59, %s60
    %p64 = pneg %p58
    %p65 = scmp.eq.s32.totalorder %s9, 1
    %p66 = por %p64, %p65
    %p67 = scmp.ne.s32.totalorder %s59, %s62
    %p68 = scmp.eq.s32.totalorder %s9, 0
    %p69 = por %p67, %p68
    %p70 = scmp.ne.s32.totalorder %s59, %s62
    %p71 = scmp.eq.s32.totalorder %s14, 1
    %p72 = por %p70, %p71
    %p73 = scmp.ne.s32.totalorder %s62, %s63
    %p74 = scmp.eq.s32.totalorder %s14, 0
    %p75 = por %p73, %p74
    %p76 = scmp.ne.s32.totalorder %s62, %s63
    %p77 = scmp.eq.s32.totalorder %s15, 1
    %p78 = por %p76, %p77
    %p80 = scmp.ne.s32.totalorder %s63, %s79
    %p81 = scmp.eq.s32.totalorder %s15, 0
    %p82 = por %p80, %p81
    %s83 = ssub.s32 %s16, %s28
    %p84 = scmp.eq.s32.totalorder %s83, 0
    %s86 = sadd.s32 %s85, 1
    %s87 = scalar_select %p84, %s85, %s86
    %p90 = pneg %p84
    %p91 = scmp.eq.s32.totalorder %s9, 1
    %p92 = por %p90, %p91
    %p93 = scmp.ne.s32.totalorder %s85, %s88
    %p94 = scmp.eq.s32.totalorder %s9, 0
    %p95 = por %p93, %p94
    %p96 = scmp.ne.s32.totalorder %s85, %s88
    %p97 = scmp.eq.s32.totalorder %s14, 1
    %p98 = por %p96, %p97
    %p99 = scmp.ne.s32.totalorder %s88, %s89
    %p100 = scmp.eq.s32.totalorder %s14, 0
    %p101 = por %p99, %p100
    %p102 = scmp.ne.s32.totalorder %s88, %s89
    %p103 = scmp.eq.s32.totalorder %s15, 1
    %p104 = por %p102, %p103
    %p106 = scmp.ne.s32.totalorder %s89, %s105
    %p107 = scmp.eq.s32.totalorder %s15, 0
    %p108 = por %p106, %p107
    %p109 = scmp.le.s32.totalorder 1, %s9
    %p110 = scmp.lt.s32.totalorder %s9, 3
    %p111 = pnand %p109, %p110
    %p112 = pneg %p111
    // Predicated region
    $region9: #{_forward_impl.2} parent=5 // pred_check
      _
    $region10: #{_forward_impl.2} parent=5 // pred_check_branch
      %114 = sbr.rel (%p111) target = $region12
    $region11: #{_forward_impl.2} parent=5 // pred_region
      %s115 = ssub.s32 %s9, 1
    $region12: #{_forward_impl.2} parent=5 // pred_fallthru
      _
    %p116 = scmp.lt.s32.totalorder %s9, 2
    // Predicated region
    $region13: #{_forward_impl.2} parent=5 // pred_check
      %p117 = pneg %p116
    $region14: #{_forward_impl.2} parent=5 // pred_check_branch
      %119 = sbr.rel (%p117) target = $region16
    $region15: #{_forward_impl.2} parent=5 // pred_region
      // Predicated region
      $region17: #{_forward_impl.2} parent=15 // pred_check
        %p120 = pneg %p43
      $region18: #{_forward_impl.2} parent=15 // pred_check_branch
        %122 = sbr.rel (%p120) target = $region20
      $region19: #{_forward_impl.2} parent=15 // pred_region
        %s123 = smul.u32 2, %s17
        %p124 = scmp.lt.s32.totalorder %s16, 1
        %s125 = scalar_select %p124, %s16, 1
        %p126 = scmp.lt.s32.totalorder %s123, 1
        %s127 = scalar_select %p126, %s123, 1
        %s128 = smul.addr %s125, 4
        %s129 = sadd.s32 %s127, %s128
        %s130 = smul.addr %s129, 8
        %s131 = scalar_lea.vmem %s0, %s130
        %s132 = smul.u32 2, %s17
      $region20: #{_forward_impl.2} parent=15 // pred_fallthru
        _
    $region16: #{_forward_impl.2} parent=5 // pred_fallthru
      _
    %p133 = scmp.le.s32.totalorder 1, %s9
    %p134 = scmp.lt.s32.totalorder %s9, 3
    %p135 = pnand %p133, %p134
    %p136 = pneg %p135
    // Predicated region
    $region21: #{_forward_impl.2} parent=5 // pred_check
      _
    $region22: #{_forward_impl.2} parent=5 // pred_check_branch
      %138 = sbr.rel (%p135) target = $region24
    $region23: #{_forward_impl.2} parent=5 // pred_region
      %s139 = ssub.s32 %s9, 1
      %s140 = smul.u32 2, %s19
      %p141 = scmp.lt.s32.totalorder %s18, 1
      %s142 = scalar_select %p141, %s18, 1
      %p143 = scmp.lt.s32.totalorder %s140, 1
      %s144 = scalar_select %p143, %s140, 1
      %s145 = smul.addr %s142, 4
      %s146 = sadd.s32 %s144, %s145
      %s147 = smul.addr %s146, 8
      %s148 = scalar_lea.vmem %s0, %s147
      %p149 = pneg %p49
      %p150 = pneg %p46
      %p151 = pneg %p75
      %p152 = pneg %p72
      %p153 = scmp.lt.s32.totalorder %s18, 1
      %s154 = scalar_select %p153, %s18, 1
      %s155 = smul.addr %s154, 2
      %s156 = smul.addr %s155, 8
      %s157 = scalar_lea.vmem %s1, %s156
      %p158 = pneg %p101
      %p159 = pneg %p98
      %p160 = scmp.lt.s32.totalorder %s18, 1
      %s161 = scalar_select %p160, %s18, 1
      %s162 = smul.addr %s161, 2
      %s163 = smul.addr %s162, 8
      %s164 = scalar_lea.vmem %s2, %s163
      %s165 = smul.u32 2, %s19
      %p166 = scmp.lt.s32.totalorder %s18, 1
      %s167 = scalar_select %p166, %s18, 1
      %p168 = scmp.lt.s32.totalorder %s165, 1
      %s169 = scalar_select %p168, %s165, 1
      %s170 = smul.addr %s167, 4
      %s171 = sadd.s32 %s169, %s170
      %s172 = smul.addr %s171, 8
      %s173 = scalar_lea.vmem %s0, %s172
      %s174 = smul.u32 2, %s19
      %p175 = scmp.lt.s32.totalorder %s18, 1
      %s176 = scalar_select %p175, %s18, 1
      %s177 = smul.addr %s176, 2
      %s178 = smul.addr %s177, 8
      %s179 = scalar_lea.vmem %s1, %s178
      %p180 = scmp.lt.s32.totalorder %s18, 1
      %s181 = scalar_select %p180, %s18, 1
      %s182 = smul.addr %s181, 2
      %s183 = smul.addr %s182, 8
      %s184 = scalar_lea.vmem %s2, %s183
      %p185 = scmp.eq.s32.totalorder %s19, 0
      // Predicated region
      $region25: #{_forward_impl.2} parent=23 // pred_check
        %p186 = pneg %p185
      $region26: #{_forward_impl.2} parent=23 // pred_check_branch
        %188 = sbr.rel (%p186) target = $region28
      $region27: #{_forward_impl.2} parent=23 // pred_region
        %vm189 = vcmask 7168
        %190 = vst.msk [vmem:[%s179] sm:$0xff] %vm189, 0.0
        %191 = vst.msk [vmem:[%s179 + $0x8] sm:$0xff] %vm189, 0.0
        %vm192 = vcmask 130048
        %193 = vst.msk [vmem:[%s184] sm:$0xff] %vm192, 0.0
        %194 = vst.msk [vmem:[%s184 + $0x8] sm:$0xff] %vm192, 0.0
      $region28: #{_forward_impl.2} parent=23 // pred_fallthru
        _
      %v195 = vld [vmem:[%s173] sm:$0xff]
      %v196 = vld [vmem:[%s173 + $0x8] sm:$0xff]
      %v197 = vld [vmem:[%s173 + $0x10] sm:$0xff]
      %v198 = vld [vmem:[%s173 + $0x18] sm:$0xff]
      %v199 = vld [vmem:[%s179] sm:$0xff]
      %v200 = vld [vmem:[%s179 + $0x8] sm:$0xff]
      %v201 = vadd.f32 %v195, %v196
      %202 = vadd.xlane.f32.xlu0 %v201
      %v203 = vpop.xlane.xlu0 %202
      %v204 = vadd.f32 %v197, %v198
      %205 = vadd.xlane.f32.xlu0 %v204
      %v206 = vpop.xlane.xlu0 %205
      %v207 = vadd.f32 %v199, %v203
      %v208 = vadd.f32 %v200, %v206
      %vm209 = vcmask 7168
      %210 = vst.msk [vmem:[%s179] sm:$0xff] %vm209, %v207
      %211 = vst.msk [vmem:[%s179 + $0x8] sm:$0xff] %vm209, %v208
      %v212 = vld [vmem:[%s184] sm:$0xff]
      %v213 = vld [vmem:[%s184 + $0x8] sm:$0xff]
      %214 = vmatprep.subr.mxu0 %v196
      %215 = vmatpush1.xpose.msra.mxu0 %v195
      %216 = vmatprep.subr.mxu0 %v198
      %217 = vmatpush1.xpose.msra.mxu0 %v197
      %218 = vmatprep.subr.mxu0 0.0
      %219 = vmatpush1.xpose.msra.mxu0 0.0
      %220 = vmatprep.subr.mxu0 0.0
      %221 = vmatpush1.xpose.msra.mxu0 0.0
      %222 = vmatprep.subr.mxu0 0.0
      %223 = vmatpush1.xpose.msra.mxu0 0.0
      %224 = vmatprep.subr.mxu0 0.0
      %225 = vmatpush1.xpose.msra.mxu0 0.0
      %226 = vmatprep.subr.mxu0 0.0
      %227 = vmatpush1.xpose.msra.mxu0 0.0
      %228 = vmatprep.subr.mxu0 0.0
      %229 = vmatpush1.xpose.msra.mxu0 0.0
      %230 = vmatprep.subr.mxu0 0.0
      %231 = vmatpush1.xpose.msra.mxu0 0.0
      %232 = vmatprep.subr.mxu0 0.0
      %233 = vmatpush1.xpose.msra.mxu0 0.0
      %234 = vmatprep.subr.mxu0 0.0
      %235 = vmatpush1.xpose.msra.mxu0 0.0
      %236 = vmatprep.subr.mxu0 0.0
      %237 = vmatpush1.xpose.msra.mxu0 0.0
      %238 = vmatprep.subr.mxu0 0.0
      %239 = vmatpush1.xpose.msra.mxu0 0.0
      %240 = vmatprep.subr.mxu0 0.0
      %241 = vmatpush1.xpose.msra.mxu0 0.0
      %242 = vmatprep.subr.mxu0 0.0
      %243 = vmatpush1.xpose.msra.mxu0 0.0
      %244 = vmatprep.subr.mxu0 0.0
      %245 = vmatpush1.xpose.msra.mxu0 0.0
      %246 = vmatprep.subr.mxu0 0.0
      %247 = vmatpush1.xpose.msra.mxu0 0.0
      %248 = vmatprep.subr.mxu0 0.0
      %249 = vmatpush1.xpose.msra.mxu0 0.0
      %250 = vmatprep.subr.mxu0 0.0
      %251 = vmatpush1.xpose.msra.mxu0 0.0
      %252 = vmatprep.subr.mxu0 0.0
      %253 = vmatpush1.xpose.msra.mxu0 0.0
      %254 = vmatprep.subr.mxu0 0.0
      %255 = vmatpush1.xpose.msra.mxu0 0.0
      %256 = vmatprep.subr.mxu0 0.0
      %257 = vmatpush1.xpose.msra.mxu0 0.0
      %258 = vmatprep.subr.mxu0 0.0
      %259 = vmatpush1.xpose.msra.mxu0 0.0
      %260 = vmatprep.subr.mxu0 0.0
      %261 = vmatpush1.xpose.msra.mxu0 0.0
      %262 = vmatprep.subr.mxu0 0.0
      %263 = vmatpush1.xpose.msra.mxu0 0.0
      %264 = vmatprep.subr.mxu0 0.0
      %265 = vmatpush1.xpose.msra.mxu0 0.0
      %266 = vmatprep.subr.mxu0 0.0
      %267 = vmatpush1.xpose.msra.mxu0 0.0
      %268 = vmatprep.subr.mxu0 0.0
      %269 = vmatpush1.xpose.msra.mxu0 0.0
      %270 = vmatprep.subr.mxu0 0.0
      %271 = vmatpush1.xpose.msra.mxu0 0.0
      %272 = vmatprep.subr.mxu0 0.0
      %273 = vmatpush1.xpose.msra.mxu0 0.0
      %274 = vmatprep.subr.mxu0 0.0
      %275 = vmatpush1.xpose.msra.mxu0 0.0
      %276 = vmatprep.subr.mxu0 0.0
      %277 = vmatpush1.xpose.msra.mxu0 0.0
      %278 = vmatprep.mubr.f32.mxu0 %v196
      %279 = vmatmul.mubr.f32.gmra.mrb[0].mxu0 %v195
      %v280 = vpop.f32.mrb[0].mxu0
      %v281 = vadd.f32 0.0, %v280
      %v282 = vpop.f32.mrb[0].mxu0
      %283 = vmatprep.mubr.f32.mxu0 %v198
      %284 = vmatmul.mubr.f32.gmra.mrb[0].mxu0 %v197
      %v285 = vpop.f32.mrb[0].mxu0
      %v286 = vadd.f32 0.0, %v285
      %v287 = vpop.f32.mrb[0].mxu0
      %288 = vdwg.mxu0
      %v289 = vadd.f32 %v212, %v281
      %v290 = vadd.f32 %v213, %v286
      %vm291 = vcmask 130048
      %292 = vst.msk [vmem:[%s184] sm:$0xff] %vm291, %v289
      %293 = vst.msk [vmem:[%s184 + $0x8] sm:$0xff] %vm291, %v290
      %p294 = scmp.lt.s32.totalorder %s18, 1
      %s295 = scalar_select %p294, %s18, 1
      %s296 = smul.addr %s295, 2
      %s297 = smul.addr %s296, 8
      %s298 = scalar_lea.vmem %s1, %s297
      %p299 = scmp.lt.s32.totalorder %s18, 1
      %s300 = scalar_select %p299, %s18, 1
      %s301 = smul.addr %s300, 2
      %s302 = smul.addr %s301, 8
      %s303 = scalar_lea.vmem %s2, %s302
      // Predicated region
      $region29: #{_forward_impl.2} parent=23 // pred_check
        %p304 = pneg %p72
      $region30: #{_forward_impl.2} parent=23 // pred_check_branch
        %306 = sbr.rel (%p304) target = $region32
      $region31: #{_forward_impl.2} parent=23 // pred_region
        _
      $region32: #{_forward_impl.2} parent=23 // pred_fallthru
        _
      // Predicated region
      $region33: #{_forward_impl.2} parent=23 // pred_check
        %p307 = pneg %p98
      $region34: #{_forward_impl.2} parent=23 // pred_check_branch
        %309 = sbr.rel (%p307) target = $region36
      $region35: #{_forward_impl.2} parent=23 // pred_region
        _
      $region36: #{_forward_impl.2} parent=23 // pred_fallthru
        _
    $region24: #{_forward_impl.2} parent=5 // pred_fallthru
      _
    %p310 = scmp.le.s32.totalorder 2, %s9
    // Predicated region
    $region37: #{_forward_impl.2} parent=5 // pred_check
      %p311 = pneg %p310
    $region38: #{_forward_impl.2} parent=5 // pred_check_branch
      %313 = sbr.rel (%p311) target = $region40
    $region39: #{_forward_impl.2} parent=5 // pred_region
      %s314 = ssub.s32 %s9, 2
      // Predicated region
      $region41: #{_forward_impl.2} parent=39 // pred_check
        %p315 = pneg %p78
      $region42: #{_forward_impl.2} parent=39 // pred_check_branch
        %317 = sbr.rel (%p315) target = $region44
      $region43: #{_forward_impl.2} parent=39 // pred_region
        %p318 = scmp.lt.s32.totalorder %s20, 1
        %s319 = scalar_select %p318, %s20, 1
        %s320 = smul.addr %s319, 2
        %s321 = smul.addr %s320, 8
        %s322 = scalar_lea.vmem %s1, %s321
      $region44: #{_forward_impl.2} parent=39 // pred_fallthru
        _
      // Predicated region
      $region45: #{_forward_impl.2} parent=39 // pred_check
        %p323 = pneg %p104
      $region46: #{_forward_impl.2} parent=39 // pred_check_branch
        %325 = sbr.rel (%p323) target = $region48
      $region47: #{_forward_impl.2} parent=39 // pred_region
        %p326 = scmp.lt.s32.totalorder %s20, 1
        %s327 = scalar_select %p326, %s20, 1
        %s328 = smul.addr %s327, 2
        %s329 = smul.addr %s328, 8
        %s330 = scalar_lea.vmem %s2, %s329
      $region48: #{_forward_impl.2} parent=39 // pred_fallthru
        _
    $region40: #{_forward_impl.2} parent=5 // pred_fallthru
      _
  $region6: #{_forward_impl.2} parent=0 // loop_footer
    %s13 = sadd.s32 1, %s9
  $region7: #{_forward_impl.2} parent=0 // loop_footer_branch
    %8 = sbr.rel target = $region3
  $region8: #{_forward_impl.2} parent=0 // loop_exit
    _

// kernel: sub.9
$region0: #{sub.9}
  #allocation0 [shape = 's32[1]{0}', space=sflag, size = 0x4, scoped, tag = 'scoped memory for sub.9']
  %s0 = inlined_call_operand.vmem [shape: f32[16,1], index: 0, kind: input, shape index: {}]
  %s1 = inlined_call_operand.vmem [shape: f32[16,1], index: 1, kind: input, shape index: {}]
  %s2 = inlined_call_operand.vmem [shape: f32[16,1], index: 2, kind: output, shape index: {}]
  %v3 = vld [vmem:[%s0] sm:$0x1]
  %v4 = vld [vmem:[%s1] sm:$0x1]
  %5 = xla_tuple %v3, %v4
  %6 = xla_tuple %5
  %v7 = vsub.f32 %v3, %v4
  %8 = xla_tuple %v7
  %9 = vst [vmem:[%s2] sm:$0x1] %v7

// kernel: _forward_impl.3
$region0: #{_forward_impl.3}
  #allocation0 [shape = 'u32[]', space=smem, size = 0x4, offset = 0x4, fixed_abs, tag = 'smem constant byte address 0x4 - core index']
  #allocation1 [shape = 'u32[144,128]{1,0:T(1,128)}', space=vmem, size = 0x12000, scoped, tag = 'internal scratch']
  %s0 = inlined_call_operand.vmem [shape: f32[16,16], index: 0, kind: input, shape index: {}]
  %s1 = inlined_call_operand.vmem [shape: f32[16,1], index: 1, kind: input, shape index: {}]
  %s2 = inlined_call_operand.vmem [shape: f32[2,16,256], index: 2, kind: input, shape index: {}]
  %s3 = inlined_call_operand.vmem [shape: f32[2,16,256], index: 3, kind: output, shape index: {}]
  %s4 = sld [smem:[#allocation0]]
  $region22: #{_forward_impl.3} parent=0
    _
  %s6 = ssub.s32 1, %s4
  %s7 = scalar_select 0, %s6, %s4
  // Predicated region
  $region2: #{_forward_impl.3} parent=0 // pred_check
    _
  $region3: #{_forward_impl.3} parent=0 // pred_check_branch
    %9 = sbr.rel (0) target = $region5
  $region4: #{_forward_impl.3} parent=0 // pred_region
    _
  $region5: #{_forward_impl.3} parent=0 // pred_fallthru
    _
  // Predicated region
  $region6: #{_forward_impl.3} parent=0 // pred_check
    _
  $region7: #{_forward_impl.3} parent=0 // pred_check_branch
    %11 = sbr.rel (0) target = $region9
  $region8: #{_forward_impl.3} parent=0 // pred_region
    _
  $region9: #{_forward_impl.3} parent=0 // pred_fallthru
    _
  // Predicated region
  $region10: #{_forward_impl.3} parent=0 // pred_check
    _
  $region11: #{_forward_impl.3} parent=0 // pred_check_branch
    %13 = sbr.rel (0) target = $region13
  $region12: #{_forward_impl.3} parent=0 // pred_region
    _
  $region13: #{_forward_impl.3} parent=0 // pred_fallthru
    _
  %v14 = vld [vmem:[%s0] sm:$0xff]
  %v15 = vld [vmem:[%s0 + $0x8] sm:$0xff]
  %v16 = vld [vmem:[%s1] sm:$0xff]
  %v17 = vld [vmem:[%s1 + $0x8] sm:$0xff]
  %v18 = vld [vmem:[%s2] sm:$0xff]
  %v19 = vld [vmem:[%s2 + $0x8] sm:$0xff]
  %v20 = vld [vmem:[%s2 + $0x10] sm:$0xff]
  %v21 = vld [vmem:[%s2 + $0x18] sm:$0xff]
  %23 = vset.pattern.permute.xlu0 0
  %24 = vperm.xlu0 %23, %v16
  %v25 = vpop.permute.xlu0 %24
  %28 = vset.pattern.permute.xlu0 0
  %29 = vperm.xlu0 %28, %v17
  %v30 = vpop.permute.xlu0 %29
  %vm32 = vcmask 130048
  %v34 = vsel %vm32, %v14, 0
  %v37 = vsel %vm32, %v15, 0
  %39 = vmatprep.subr.mxu0 %v19
  %40 = vmatpush1.msra.mxu0 %v18
  %41 = vmatprep.subr.mxu0 %v21
  %42 = vmatpush1.msra.mxu0 %v20
  %43 = vmatprep.subr.mxu0 0.0
  %44 = vmatpush1.msra.mxu0 0.0
  %45 = vmatprep.subr.mxu0 0.0
  %46 = vmatpush1.msra.mxu0 0.0
  %47 = vmatprep.subr.mxu0 0.0
  %48 = vmatpush1.msra.mxu0 0.0
  %49 = vmatprep.subr.mxu0 0.0
  %50 = vmatpush1.msra.mxu0 0.0
  %51 = vmatprep.subr.mxu0 0.0
  %52 = vmatpush1.msra.mxu0 0.0
  %53 = vmatprep.subr.mxu0 0.0
  %54 = vmatpush1.msra.mxu0 0.0
  %55 = vmatprep.subr.mxu0 0.0
  %56 = vmatpush1.msra.mxu0 0.0
  %57 = vmatprep.subr.mxu0 0.0
  %58 = vmatpush1.msra.mxu0 0.0
  %59 = vmatprep.subr.mxu0 0.0
  %60 = vmatpush1.msra.mxu0 0.0
  %61 = vmatprep.subr.mxu0 0.0
  %62 = vmatpush1.msra.mxu0 0.0
  %63 = vmatprep.subr.mxu0 0.0
  %64 = vmatpush1.msra.mxu0 0.0
  %65 = vmatprep.subr.mxu0 0.0
  %66 = vmatpush1.msra.mxu0 0.0
  %67 = vmatprep.subr.mxu0 0.0
  %68 = vmatpush1.msra.mxu0 0.0
  %69 = vmatprep.subr.mxu0 0.0
  %70 = vmatpush1.msra.mxu0 0.0
  %71 = vmatprep.subr.mxu0 0.0
  %72 = vmatpush1.msra.mxu0 0.0
  %73 = vmatprep.subr.mxu0 0.0
  %74 = vmatpush1.msra.mxu0 0.0
  %75 = vmatprep.subr.mxu0 0.0
  %76 = vmatpush1.msra.mxu0 0.0
  %77 = vmatprep.subr.mxu0 0.0
  %78 = vmatpush1.msra.mxu0 0.0
  %79 = vmatprep.subr.mxu0 0.0
  %80 = vmatpush1.msra.mxu0 0.0
  %81 = vmatprep.subr.mxu0 0.0
  %82 = vmatpush1.msra.mxu0 0.0
  %83 = vmatprep.subr.mxu0 0.0
  %84 = vmatpush1.msra.mxu0 0.0
  %85 = vmatprep.subr.mxu0 0.0
  %86 = vmatpush1.msra.mxu0 0.0
  %87 = vmatprep.subr.mxu0 0.0
  %88 = vmatpush1.msra.mxu0 0.0
  %89 = vmatprep.subr.mxu0 0.0
  %90 = vmatpush1.msra.mxu0 0.0
  %91 = vmatprep.subr.mxu0 0.0
  %92 = vmatpush1.msra.mxu0 0.0
  %93 = vmatprep.subr.mxu0 0.0
  %94 = vmatpush1.msra.mxu0 0.0
  %95 = vmatprep.subr.mxu0 0.0
  %96 = vmatpush1.msra.mxu0 0.0
  %97 = vmatprep.subr.mxu0 0.0
  %98 = vmatpush1.msra.mxu0 0.0
  %99 = vmatprep.subr.mxu0 0.0
  %100 = vmatpush1.msra.mxu0 0.0
  %101 = vmatprep.subr.mxu0 0.0
  %102 = vmatpush1.msra.mxu0 0.0
  %103 = vmatprep.mubr.f32.mxu0 0.0
  %104 = vmatmul.mubr.f32.gmra.mrb[0].mxu0 %v34
  %v105 = vpop.f32.mrb[0].mxu0
  %v106 = vadd.f32 %v25, %v105
  %v107 = vpop.f32.mrb[0].mxu0
  %v108 = vadd.f32 %v25, %v107
  %109 = vmatprep.mubr.f32.mxu0 0.0
  %110 = vmatmul.mubr.f32.gmra.mrb[0].mxu0 %v37
  %v111 = vpop.f32.mrb[0].mxu0
  %v112 = vadd.f32 %v30, %v111
  %v113 = vpop.f32.mrb[0].mxu0
  %v114 = vadd.f32 %v30, %v113
  %115 = vdwg.mxu0
  %116 = vst [vmem:[%s3] sm:$0xff] %v106
  %117 = vst [vmem:[%s3 + $0x8] sm:$0xff] %v108
  %118 = vst [vmem:[%s3 + $0x10] sm:$0xff] %v112
  %119 = vst [vmem:[%s3 + $0x18] sm:$0xff] %v114
  %s120 = scalar_lea.vmem %s2, 32
  %v121 = vld [vmem:[%s120] sm:$0xff]
  %v122 = vld [vmem:[%s120 + $0x8] sm:$0xff]
  %v123 = vld [vmem:[%s120 + $0x10] sm:$0xff]
  %v124 = vld [vmem:[%s120 + $0x18] sm:$0xff]
  %125 = vmatprep.subr.mxu0 %v122
  %126 = vmatpush1.msra.mxu0 %v121
  %127 = vmatprep.subr.mxu0 %v124
  %128 = vmatpush1.msra.mxu0 %v123
  %129 = vmatprep.subr.mxu0 0.0
  %130 = vmatpush1.msra.mxu0 0.0
  %131 = vmatprep.subr.mxu0 0.0
  %132 = vmatpush1.msra.mxu0 0.0
  %133 = vmatprep.subr.mxu0 0.0
  %134 = vmatpush1.msra.mxu0 0.0
  %135 = vmatprep.subr.mxu0 0.0
  %136 = vmatpush1.msra.mxu0 0.0
  %137 = vmatprep.subr.mxu0 0.0
  %138 = vmatpush1.msra.mxu0 0.0
  %139 = vmatprep.subr.mxu0 0.0
  %140 = vmatpush1.msra.mxu0 0.0
  %141 = vmatprep.subr.mxu0 0.0
  %142 = vmatpush1.msra.mxu0 0.0
  %143 = vmatprep.subr.mxu0 0.0
  %144 = vmatpush1.msra.mxu0 0.0
  %145 = vmatprep.subr.mxu0 0.0
  %146 = vmatpush1.msra.mxu0 0.0
  %147 = vmatprep.subr.mxu0 0.0
  %148 = vmatpush1.msra.mxu0 0.0
  %149 = vmatprep.subr.mxu0 0.0
  %150 = vmatpush1.msra.mxu0 0.0
  %151 = vmatprep.subr.mxu0 0.0
  %152 = vmatpush1.msra.mxu0 0.0
  %153 = vmatprep.subr.mxu0 0.0
  %154 = vmatpush1.msra.mxu0 0.0
  %155 = vmatprep.subr.mxu0 0.0
  %156 = vmatpush1.msra.mxu0 0.0
  %157 = vmatprep.subr.mxu0 0.0
  %158 = vmatpush1.msra.mxu0 0.0
  %159 = vmatprep.subr.mxu0 0.0
  %160 = vmatpush1.msra.mxu0 0.0
  %161 = vmatprep.subr.mxu0 0.0
  %162 = vmatpush1.msra.mxu0 0.0
  %163 = vmatprep.subr.mxu0 0.0
  %164 = vmatpush1.msra.mxu0 0.0
  %165 = vmatprep.subr.mxu0 0.0
  %166 = vmatpush1.msra.mxu0 0.0
  %167 = vmatprep.subr.mxu0 0.0
  %168 = vmatpush1.msra.mxu0 0.0
  %169 = vmatprep.subr.mxu0 0.0
  %170 = vmatpush1.msra.mxu0 0.0
  %171 = vmatprep.subr.mxu0 0.0
  %172 = vmatpush1.msra.mxu0 0.0
  %173 = vmatprep.subr.mxu0 0.0
  %174 = vmatpush1.msra.mxu0 0.0
  %175 = vmatprep.subr.mxu0 0.0
  %176 = vmatpush1.msra.mxu0 0.0
  %177 = vmatprep.subr.mxu0 0.0
  %178 = vmatpush1.msra.mxu0 0.0
  %179 = vmatprep.subr.mxu0 0.0
  %180 = vmatpush1.msra.mxu0 0.0
  %181 = vmatprep.subr.mxu0 0.0
  %182 = vmatpush1.msra.mxu0 0.0
  %183 = vmatprep.subr.mxu0 0.0
  %184 = vmatpush1.msra.mxu0 0.0
  %185 = vmatprep.subr.mxu0 0.0
  %186 = vmatpush1.msra.mxu0 0.0
  %187 = vmatprep.subr.mxu0 0.0
  %188 = vmatpush1.msra.mxu0 0.0
  %189 = vmatprep.mubr.f32.mxu0 0.0
  %190 = vmatmul.mubr.f32.gmra.mrb[0].mxu0 %v34
  %v191 = vpop.f32.mrb[0].mxu0
  %v192 = vadd.f32 %v25, %v191
  %v193 = vpop.f32.mrb[0].mxu0
  %v194 = vadd.f32 %v25, %v193
  %195 = vmatprep.mubr.f32.mxu0 0.0
  %196 = vmatmul.mubr.f32.gmra.mrb[0].mxu0 %v37
  %v197 = vpop.f32.mrb[0].mxu0
  %v198 = vadd.f32 %v30, %v197
  %v199 = vpop.f32.mrb[0].mxu0
  %v200 = vadd.f32 %v30, %v199
  %201 = vdwg.mxu0
  %s202 = scalar_lea.vmem %s3, 32
  %203 = vst [vmem:[%s202] sm:$0xff] %v192
  %204 = vst [vmem:[%s202 + $0x8] sm:$0xff] %v194
  %205 = vst [vmem:[%s202 + $0x10] sm:$0xff] %v198
  %206 = vst [vmem:[%s202 + $0x18] sm:$0xff] %v200
  // Predicated region
  $region14: #{_forward_impl.3} parent=0 // pred_check
    _
  $region15: #{_forward_impl.3} parent=0 // pred_check_branch
    %208 = sbr.rel (0) target = $region17
  $region16: #{_forward_impl.3} parent=0 // pred_region
    _
  $region17: #{_forward_impl.3} parent=0 // pred_fallthru
    _
  // Predicated region
  $region18: #{_forward_impl.3} parent=0 // pred_check
    _
  $region19: #{_forward_impl.3} parent=0 // pred_check_branch
    %210 = sbr.rel (0) target = $region21
  $region20: #{_forward_impl.3} parent=0 // pred_region
    _
  $region21: #{_forward_impl.3} parent=0 // pred_fallthru
    _

</llo_original>
